<compile_context>
chip_gen: v6e
topology: v6e:2x2x1
jax: 0.10.0
libtpu: 0.0.40
codegen_flags: <defaults>
</compile_context>

<pallas_src>
import math

import jax
import jax.numpy as jnp
from jax.experimental import pallas as pl
from jax.experimental.pallas import tpu as pltpu


def _gated_abmil_kernel(x_ref, w_ref, b_ref, w2_ref, b2_ref, out_ref):
    # x_ref : (TB, N, D)  activations (f32 or bf16)
    # w_ref : (D, 2H)     [W1 | Wg] fused, same dtype as x
    # b_ref : (1, 2H)     [b1 | bg] fused, f32
    # w2_ref: (1, H)      fc2 weight row, f32
    # b2_ref: (1,)        fc2 bias scalar, f32, SMEM
    # out   : (TB, D)     f32
    tb, n, d = x_ref.shape
    h_dim = w2_ref.shape[1]

    x3 = x_ref[...]                                   # (TB, N, D)
    # N is a multiple of 8 (f32 sublanes) -> collapsing (TB, N) is layout-free.
    x2 = x3.reshape(tb * n, d)                        # (TB*N, D)

    # Fused fc1 + gate projection: one wide MXU matmul, f32 accumulation.
    proj = jnp.dot(x2, w_ref[...],
                   preferred_element_type=jnp.float32) + b_ref[...]   # (TB*N, 2H)

    h1 = jnp.tanh(proj[:, :h_dim])                    # (TB*N, H)  EUP/VPU, f32
    g = jax.nn.sigmoid(proj[:, h_dim:])               # (TB*N, H)
    h = h1 * g                                        # (TB*N, H)

    # fc2: Linear(H, 1) -> per-instance attention logits laid out as (TB, N).
    s = (jnp.sum(h.reshape(tb, n, h_dim) * w2_ref[...], axis=-1)
         + b2_ref[0])                                 # (TB, N)

    # Softmax over the instance axis (PyTorch dim=1), row-wise per batch.
    m = jnp.max(s, axis=-1, keepdims=True)            # (TB, 1)
    e = jnp.exp(s - m)                                # (TB, N) unnormalized weights
    den = jnp.sum(e, axis=-1, keepdims=True)          # (TB, 1)
    inv = pl.reciprocal(den, approx=True)             # EUP slot
    inv = inv * (2.0 - den * inv)                     # Newton step 1
    inv = inv * (2.0 - den * inv)                     # Newton step 2 -> f32-exact

    # Pooling on the MXU: (TB, 1, N) @ (TB, N, D) -> (TB, 1, D), then normalize.
    a3 = e.astype(x3.dtype).reshape(tb, 1, n)
    pooled = jnp.einsum('bqn,bnd->bqd', a3, x3,
                        preferred_element_type=jnp.float32)           # (TB, 1, D)
    out_ref[...] = (pooled.reshape(tb, d) * inv).astype(out_ref.dtype)


def _pick_block_b(batch):
    """Largest power-of-two divisor of `batch`, capped at 8 (f32 sublanes)."""
    tb = 1
    while tb < 8 and batch % (tb * 2) == 0:
        tb *= 2
    return tb


def gated_abmil_pooling(x, w1, b1, wg, bg, w2, b2, *, block_b=None,
                        use_bf16_matmul=False, vmem_limit_bytes=None):
    """Gated ABMIL pooling.

    x: (B, N, D) f32; w1/wg: (D, H) (stored transposed vs. nn.Linear);
    b1/bg: (H,); w2: (H,); b2: (1,).  Returns (B, D) f32.
    """
    B, N, D = x.shape
    H = w1.shape[1]

    if block_b is None:
        block_b = _pick_block_b(B)
    assert B % block_b == 0, (B, block_b)
    # TODO(synk): for bags whose (block_b*N*D) slab exceeds the VMEM budget
    # (notably v7x's 64 MiB), stream N with an online softmax instead of
    # loading the full per-batch slab.

    # Fuse the two projections into one wide matmul: [W1 | Wg], [b1 | bg].
    w_fused = jnp.concatenate([w1, wg], axis=1)                  # (D, 2H)
    b_fused = jnp.concatenate([b1, bg]).reshape(1, 2 * H)        # (1, 2H) f32
    w2_row = w2.reshape(1, H).astype(jnp.float32)
    b2_s = b2.reshape(1).astype(jnp.float32)

    if use_bf16_matmul:
        # bf16 MXU operands (v6e/v7x native, halves HBM bytes for x);
        # accumulation and all activation/softmax math stay f32.
        x = x.astype(jnp.bfloat16)
        w_fused = w_fused.astype(jnp.bfloat16)

    return pl.pallas_call(
        _gated_abmil_kernel,
        out_shape=jax.ShapeDtypeStruct((B, D), jnp.float32),
        grid_spec=pltpu.PrefetchScalarGridSpec(
            num_scalar_prefetch=0,
            grid=(B // block_b,),
            in_specs=[
                pl.BlockSpec((block_b, N, D), lambda b: (b, 0, 0)),    # x tile
                pl.BlockSpec((D, 2 * H), lambda b: (0, 0)),            # [W1|Wg]
                pl.BlockSpec((1, 2 * H), lambda b: (0, 0)),            # [b1|bg]
                pl.BlockSpec((1, H), lambda b: (0, 0)),                # W2 row
                pl.BlockSpec(memory_space=pltpu.MemorySpace.SMEM),     # b2 scalar
            ],
            out_specs=pl.BlockSpec((block_b, D), lambda b: (b, 0)),
        ),
        compiler_params=pltpu.CompilerParams(
            dimension_semantics=("parallel",),
            vmem_limit_bytes=vmem_limit_bytes),
    )(x, w_fused, b_fused, w2_row, b2_s)


def reference(x, w1, b1, wg, bg, w2, b2):
    """Pure-JAX reference mirroring the PyTorch forward."""
    h = jnp.tanh(x @ w1 + b1) * jax.nn.sigmoid(x @ wg + bg)   # (B, N, H)
    h = h @ w2.reshape(-1, 1) + b2                            # (B, N, 1)
    attn_w = jnp.swapaxes(jax.nn.softmax(h, axis=1), -1, -2)  # (B, 1, N)
    out = attn_w @ x                                          # (B, 1, D)
    return jnp.squeeze(out, axis=1)                           # (B, D)


if __name__ == "__main__":
    # Small demo shapes: batch of bags B, instances per bag N, input_dim D,
    # hidden_dim H.  N is a multiple of 8 so the (TB, N, D)->(TB*N, D) view is
    # free; B=16 gives TB=8 (sublane-dense output) and a 2-step parallel grid.
    B, N, D, H = 16, 16, 32, 32

    key = jax.random.PRNGKey(0)
    kx, k1, k2, k3, k4, k5, k6 = jax.random.split(key, 7)

    x = jax.random.normal(kx, (B, N, D), dtype=jnp.float32)

    # Deterministic "Linear" params (stored already transposed: (in, out)).
    scale_d = 1.0 / math.sqrt(D)
    scale_h = 1.0 / math.sqrt(H)
    w1 = jax.random.uniform(k1, (D, H), jnp.float32, -scale_d, scale_d)
    b1 = jax.random.uniform(k2, (H,), jnp.float32, -scale_d, scale_d)
    wg = jax.random.uniform(k3, (D, H), jnp.float32, -scale_d, scale_d)
    bg = jax.random.uniform(k4, (H,), jnp.float32, -scale_d, scale_d)
    w2 = jax.random.uniform(k5, (H,), jnp.float32, -scale_h, scale_h)
    b2 = jax.random.uniform(k6, (1,), jnp.float32, -scale_h, scale_h)

    ref = reference(x, w1, b1, wg, bg, w2, b2)

    # f32 path: exact parity with the PyTorch forward.
    out = gated_abmil_pooling(x, w1, b1, wg, bg, w2, b2)
    jax.block_until_ready(out)
    assert out.shape == (B, D), out.shape
    assert jnp.allclose(out, ref, atol=1e-5, rtol=1e-5), (
        f"f32 max err {jnp.max(jnp.abs(out - ref))}")

    # bf16-matmul path (v6e/v7x MXU-friendly); activations/softmax stay f32,
    # so only the bf16 input rounding shows up -> loose tolerance.
    out_bf16 = gated_abmil_pooling(x, w1, b1, wg, bg, w2, b2,
                                   use_bf16_matmul=True)
    jax.block_until_ready(out_bf16)
    assert out_bf16.shape == (B, D), out_bf16.shape
    assert jnp.allclose(out_bf16, ref, atol=5e-2, rtol=5e-2), (
        f"bf16 max err {jnp.max(jnp.abs(out_bf16 - ref))}")

    print("KERNEL_OK")
</pallas_src>

<mosaic_0001>
module attributes {stable_mosaic.version = 11 : i64} {
  func.func @_gated_abmil_kernel(%arg0: i32, %arg1: memref<8x16x32xf32, #tpu.memory_space<vmem>>, %arg2: memref<32x64xf32, #tpu.memory_space<vmem>>, %arg3: memref<1x64xf32, #tpu.memory_space<vmem>>, %arg4: memref<1x32xf32, #tpu.memory_space<vmem>>, %arg5: memref<1xf32, #tpu.memory_space<smem>>, %arg6: memref<8x32xf32, #tpu.memory_space<vmem>>) attributes {dimension_semantics = [#tpu.dimension_semantics<parallel>], iteration_bounds = array<i64: 2>, scalar_prefetch = 0 : i64, scratch_operands = 0 : i64, tpu.core_type = #tpu.core_type<tc>, window_params = [{transform_indices = @transform_0, window_bounds = array<i64: 8, 16, 32>}, {pipeline_mode = #tpu.pipeline_mode<synchronous>, transform_indices = @transform_1, window_bounds = array<i64: 32, 64>}, {pipeline_mode = #tpu.pipeline_mode<synchronous>, transform_indices = @transform_2, window_bounds = array<i64: 1, 64>}, {pipeline_mode = #tpu.pipeline_mode<synchronous>, transform_indices = @transform_3, window_bounds = array<i64: 1, 32>}, {transform_indices = @transform_4, window_bounds = array<i64: 1>}, {transform_indices = @transform_5, window_bounds = array<i64: 8, 32>}]} {
    %c0 = arith.constant 0 : index
    %c0_0 = arith.constant 0 : index
    %c0_1 = arith.constant 0 : index
    %0 = vector.load %arg1[%c0, %c0_0, %c0_1] : memref<8x16x32xf32, #tpu.memory_space<vmem>>, vector<8x16x32xf32>
    %1 = vector.shape_cast %0 : vector<8x16x32xf32> to vector<128x32xf32>
    %c0_2 = arith.constant 0 : index
    %c0_3 = arith.constant 0 : index
    %2 = vector.load %arg2[%c0_2, %c0_3] : memref<32x64xf32, #tpu.memory_space<vmem>>, vector<32x64xf32>
    %cst = arith.constant dense<0.000000e+00> : vector<128x64xf32>
    %3 = tpu.matmul %1, %2, %cst {dimension_numbers = #tpu.dot_dimension_numbers<[1], [0], [0], [1], [0, 0, 1, 1], [], []>} : vector<128x32xf32>, vector<32x64xf32>, vector<128x64xf32> -> vector<128x64xf32>
    %c0_4 = arith.constant 0 : index
    %c0_5 = arith.constant 0 : index
    %4 = vector.load %arg3[%c0_4, %c0_5] : memref<1x64xf32, #tpu.memory_space<vmem>>, vector<1x64xf32>
    %5 = vector.broadcast %4 : vector<1x64xf32> to vector<128x64xf32>
    %6 = arith.addf %3, %5 : vector<128x64xf32>
    %7 = vector.extract_strided_slice %6 {offsets = [0, 0], sizes = [128, 32], strides = [1, 1]} : vector<128x64xf32> to vector<128x32xf32>
    %8 = math.tanh %7 : vector<128x32xf32>
    %9 = vector.extract_strided_slice %6 {offsets = [0, 32], sizes = [128, 32], strides = [1, 1]} : vector<128x64xf32> to vector<128x32xf32>
    %10 = arith.negf %9 : vector<128x32xf32>
    %11 = math.exp %10 : vector<128x32xf32>
    %cst_6 = arith.constant 1.000000e+00 : f32
    %12 = vector.broadcast %cst_6 : f32 to vector<128x32xf32>
    %13 = arith.addf %12, %11 : vector<128x32xf32>
    %14 = arith.divf %12, %13 : vector<128x32xf32>
    %15 = arith.mulf %8, %14 : vector<128x32xf32>
    %16 = vector.shape_cast %15 : vector<128x32xf32> to vector<8x16x32xf32>
    %c0_7 = arith.constant 0 : index
    %c0_8 = arith.constant 0 : index
    %17 = vector.load %arg4[%c0_7, %c0_8] : memref<1x32xf32, #tpu.memory_space<vmem>>, vector<1x32xf32>
    %18 = vector.shape_cast %17 : vector<1x32xf32> to vector<1x1x32xf32>
    %19 = vector.broadcast %18 : vector<1x1x32xf32> to vector<8x16x32xf32>
    %20 = arith.mulf %16, %19 : vector<8x16x32xf32>
    %cst_9 = arith.constant dense<0.000000e+00> : vector<8x16xf32>
    %21 = vector.multi_reduction <add>, %20, %cst_9 [2] : vector<8x16x32xf32> to vector<8x16xf32>
    %c0_10 = arith.constant 0 : index
    %22 = memref.load %arg5[%c0_10] : memref<1xf32, #tpu.memory_space<smem>>
    %23 = vector.broadcast %22 : f32 to vector<8x16xf32>
    %24 = arith.addf %21, %23 : vector<8x16xf32>
    %cst_11 = arith.constant dense<0xFF800000> : vector<8xf32>
    %25 = vector.multi_reduction <maximumf>, %24, %cst_11 [1] : vector<8x16xf32> to vector<8xf32>
    %26 = vector.shape_cast %25 : vector<8xf32> to vector<8x1xf32>
    %27 = vector.broadcast %26 : vector<8x1xf32> to vector<8x16xf32>
    %28 = arith.subf %24, %27 : vector<8x16xf32>
    %29 = math.exp %28 : vector<8x16xf32>
    %cst_12 = arith.constant dense<0.000000e+00> : vector<8xf32>
    %30 = vector.multi_reduction <add>, %29, %cst_12 [1] : vector<8x16xf32> to vector<8xf32>
    %31 = vector.shape_cast %30 : vector<8xf32> to vector<8x1xf32>
    %32 = tpu.reciprocal %31 {approx = true} : vector<8x1xf32> -> vector<8x1xf32>
    %33 = arith.mulf %31, %32 : vector<8x1xf32>
    %cst_13 = arith.constant 2.000000e+00 : f32
    %34 = vector.broadcast %cst_13 : f32 to vector<8x1xf32>
    %35 = arith.subf %34, %33 : vector<8x1xf32>
    %36 = arith.mulf %32, %35 : vector<8x1xf32>
    %37 = arith.mulf %31, %36 : vector<8x1xf32>
    %cst_14 = arith.constant 2.000000e+00 : f32
    %38 = vector.broadcast %cst_14 : f32 to vector<8x1xf32>
    %39 = arith.subf %38, %37 : vector<8x1xf32>
    %40 = arith.mulf %36, %39 : vector<8x1xf32>
    %41 = vector.shape_cast %29 : vector<8x16xf32> to vector<8x1x16xf32>
    "tpu.trace_start"() <{level = 10 : i32, message = "bqn,bnd->bqd"}> : () -> ()
    %cst_15 = arith.constant dense<0.000000e+00> : vector<8x1x32xf32>
    %42 = tpu.matmul %41, %0, %cst_15 {dimension_numbers = #tpu.dot_dimension_numbers<[2], [1], [1], [2], [0, 0, 0, 1, 1, 2], [0], [0]>} : vector<8x1x16xf32>, vector<8x16x32xf32>, vector<8x1x32xf32> -> vector<8x1x32xf32>
    "tpu.trace_stop"() : () -> ()
    %43 = vector.shape_cast %42 : vector<8x1x32xf32> to vector<8x32xf32>
    %44 = vector.broadcast %40 : vector<8x1xf32> to vector<8x32xf32>
    %45 = arith.mulf %43, %44 : vector<8x32xf32>
    %c0_16 = arith.constant 0 : index
    %c0_17 = arith.constant 0 : index
    %46 = vector.load %arg6[%c0_16, %c0_17] : memref<8x32xf32, #tpu.memory_space<vmem>>, vector<8x32xf32>
    tpu.vector_store %arg6[%c0_16, %c0_17], %45 {strides = array<i32>} : memref<8x32xf32, #tpu.memory_space<vmem>>, vector<8x32xf32>,
    return
  }
  func.func @transform_0(%arg0: i32) -> (i32, i32, i32) {
    %c0_i32 = arith.constant 0 : i32
    %c0_i32_0 = arith.constant 0 : i32
    %c0_i32_1 = arith.constant 0 : i32
    return %arg0, %c0_i32, %c0_i32_0 : i32, i32, i32
  }
  func.func @transform_1(%arg0: i32) -> (i32, i32) {
    %c0_i32 = arith.constant 0 : i32
    %c0_i32_0 = arith.constant 0 : i32
    %c0_i32_1 = arith.constant 0 : i32
    return %c0_i32, %c0_i32_0 : i32, i32
  }
  func.func @transform_2(%arg0: i32) -> (i32, i32) {
    %c0_i32 = arith.constant 0 : i32
    %c0_i32_0 = arith.constant 0 : i32
    %c0_i32_1 = arith.constant 0 : i32
    return %c0_i32, %c0_i32_0 : i32, i32
  }
  func.func @transform_3(%arg0: i32) -> (i32, i32) {
    %c0_i32 = arith.constant 0 : i32
    %c0_i32_0 = arith.constant 0 : i32
    %c0_i32_1 = arith.constant 0 : i32
    return %c0_i32, %c0_i32_0 : i32, i32
  }
  func.func @transform_4(%arg0: i32) -> i32 {
    %c0_i32 = arith.constant 0 : i32
    %c0_i32_0 = arith.constant 0 : i32
    return %c0_i32 : i32
  }
  func.func @transform_5(%arg0: i32) -> (i32, i32) {
    %c0_i32 = arith.constant 0 : i32
    %c0_i32_0 = arith.constant 0 : i32
    return %arg0, %c0_i32 : i32, i32
  }
}

</mosaic_0001>

<llo_original>
// kernel: tpu_custom_call.1
$region0: #{tpu_custom_call.1}
  #allocation0 [shape = 'u32[]', space=smem, size = 0x4, offset = 0x4, fixed_abs, tag = 'smem constant byte address 0x4 - core index']
  #allocation1 [shape = 'u32[144,128]{1,0:T(1,128)}', space=vmem, size = 0x12000, scoped, tag = 'internal scratch']
  #allocation2 [shape = 'f32[1]{0:T(128)S(6)}', space=smem, size = 0x200, scoped, tag = 'scoped memory for tpu_custom_call.1']
  %s0 = inlined_call_operand.hbm [shape: f32[16,16,32], index: 0, kind: input, shape index: {}]
  %s1 = inlined_call_operand.hbm [shape: f32[32,64], index: 1, kind: input, shape index: {}]
  %s2 = inlined_call_operand.vmem [shape: f32[1,64], index: 2, kind: input, shape index: {}]
  %s3 = inlined_call_operand.vmem [shape: f32[1,32], index: 3, kind: input, shape index: {}]
  %s4 = inlined_call_operand.<no memory space> [shape: f32[1], index: 4, kind: input, shape index: {}]
  %s5 = inlined_call_operand.hbm [shape: f32[16,32], index: 5, kind: output, shape index: {}]
  %s6 = sld [smem:[#allocation0]]
  $region61: #{tpu_custom_call.1} parent=0
    _
  %s8 = ssub.s32 1, %s6
  %s9 = scalar_select 0, %s8, %s6
  %10 = sst [smem:[#allocation2]] %s4
  $region1: #{tpu_custom_call.1} parent=0
    #allocation3 [shape = 'u8[131072]{0}', space=vmem, size = 0x20000, scoped, tag = 'input window, operand 0']
    #allocation4 [shape = 's32[2]{0}', space=sflag, size = 0x8, scoped, tag = 'scoped memory for tpu_custom_call.1']
    #allocation5 [shape = 's32[2]{0}', space=sflag, size = 0x8, scoped, tag = 'scoped memory for tpu_custom_call.1']
    #allocation6 [shape = 'u8[16384]{0}', space=vmem, size = 0x4000, scoped, tag = 'input window, operand 1, single buffered']
    #allocation7 [shape = 's32[1]{0}', space=sflag, size = 0x4, scoped, tag = 'scoped memory for tpu_custom_call.1']
    #allocation8 [shape = 'u8[8192]{0}', space=vmem, size = 0x2000, scoped, tag = 'output window, operand 0']
    %11 = vsyncpa [#allocation4], 0
    %s12 = scalar_lea.sflag [#allocation4], 1
    %13 = vsyncpa %s12, 0
    %14 = vsyncpa [#allocation7], 0
    %15 = vsyncpa [#allocation5], 0
    %s16 = scalar_lea.sflag [#allocation5], 1
    %17 = vsyncpa %s16, 0
    loop: start=0, step=1, limit=4
    $region2: #{tpu_custom_call.1} parent=1 // loop_pre_header
      _
    $region3: #{tpu_custom_call.1} parent=1 // loop_header
      %s19 = sphi 0, %s23
      %p20 = scmp.ge.s32.totalorder %s19, 4
      %s29 = sphi 0, %s31
      %s32 = sphi 0, %s29
      %s33 = sphi 0, %s32
      %s49 = sphi 0, %s33
      %s53 = sphi 0, %s53
      %s55 = sphi 0, %s53
      %s56 = sphi 0, %s55
      %s70 = sphi 0, %s56
      %s74 = sphi 0, %s74
      %s76 = sphi 0, %s74
      %s77 = sphi 0, %s76
      %s91 = sphi 0, %s77
      %s95 = sphi 0, %s95
      %s97 = sphi 0, %s95
      %s98 = sphi 0, %s97
      %s112 = sphi 0, %s98
      %s116 = sphi 0, %s116
      %s118 = sphi 0, %s116
      %s119 = sphi 0, %s118
      %s133 = sphi 0, %s119
      %s139 = sphi 0, %s141
      %s142 = sphi 0, %s139
      %s143 = sphi 0, %s142
      %s159 = sphi 0, %s143
    $region4: #{tpu_custom_call.1} parent=1 // loop_header_branch
      %22 = sbr.rel (%p20) target = $region8
    $region5: #{tpu_custom_call.1} parent=1 // loop_body
      %s24 = ssub.s32 %s19, 1
      %s25 = ssub.s32 %s19, 2
      %s26 = sadd.s32 %s19, 1
      %s27 = ssub.s32 %s19, %s26
      %p28 = scmp.eq.s32.totalorder %s27, 0
      %s30 = sadd.s32 %s29, 1
      %s31 = scalar_select %p28, %s29, %s30
      %p34 = pneg %p28
      %p35 = scmp.eq.s32.totalorder %s19, 1
      %p36 = por %p34, %p35
      %p37 = scmp.ne.s32.totalorder %s29, %s32
      %p38 = scmp.eq.s32.totalorder %s19, 0
      %p39 = por %p37, %p38
      %p40 = scmp.ne.s32.totalorder %s29, %s32
      %p41 = scmp.eq.s32.totalorder %s24, 1
      %p42 = por %p40, %p41
      %p43 = scmp.ne.s32.totalorder %s32, %s33
      %p44 = scmp.eq.s32.totalorder %s24, 0
      %p45 = por %p43, %p44
      %p46 = scmp.ne.s32.totalorder %s32, %s33
      %p47 = scmp.eq.s32.totalorder %s25, 1
      %p48 = por %p46, %p47
      %p50 = scmp.ne.s32.totalorder %s33, %s49
      %p51 = scmp.eq.s32.totalorder %s25, 0
      %p52 = por %p50, %p51
      %s54 = sadd.s32 %s53, 1
      %p57 = scmp.eq.s32.totalorder %s19, 1
      %p58 = scmp.ne.s32.totalorder %s53, %s55
      %p59 = scmp.eq.s32.totalorder %s19, 0
      %p60 = por %p58, %p59
      %p61 = scmp.ne.s32.totalorder %s53, %s55
      %p62 = scmp.eq.s32.totalorder %s24, 1
      %p63 = por %p61, %p62
      %p64 = scmp.ne.s32.totalorder %s55, %s56
      %p65 = scmp.eq.s32.totalorder %s24, 0
      %p66 = por %p64, %p65
      %p67 = scmp.ne.s32.totalorder %s55, %s56
      %p68 = scmp.eq.s32.totalorder %s25, 1
      %p69 = por %p67, %p68
      %p71 = scmp.ne.s32.totalorder %s56, %s70
      %p72 = scmp.eq.s32.totalorder %s25, 0
      %p73 = por %p71, %p72
      %s75 = sadd.s32 %s74, 1
      %p78 = scmp.eq.s32.totalorder %s19, 1
      %p79 = scmp.ne.s32.totalorder %s74, %s76
      %p80 = scmp.eq.s32.totalorder %s19, 0
      %p81 = por %p79, %p80
      %p82 = scmp.ne.s32.totalorder %s74, %s76
      %p83 = scmp.eq.s32.totalorder %s24, 1
      %p84 = por %p82, %p83
      %p85 = scmp.ne.s32.totalorder %s76, %s77
      %p86 = scmp.eq.s32.totalorder %s24, 0
      %p87 = por %p85, %p86
      %p88 = scmp.ne.s32.totalorder %s76, %s77
      %p89 = scmp.eq.s32.totalorder %s25, 1
      %p90 = por %p88, %p89
      %p92 = scmp.ne.s32.totalorder %s77, %s91
      %p93 = scmp.eq.s32.totalorder %s25, 0
      %p94 = por %p92, %p93
      %s96 = sadd.s32 %s95, 1
      %p99 = scmp.eq.s32.totalorder %s19, 1
      %p100 = scmp.ne.s32.totalorder %s95, %s97
      %p101 = scmp.eq.s32.totalorder %s19, 0
      %p102 = por %p100, %p101
      %p103 = scmp.ne.s32.totalorder %s95, %s97
      %p104 = scmp.eq.s32.totalorder %s24, 1
      %p105 = por %p103, %p104
      %p106 = scmp.ne.s32.totalorder %s97, %s98
      %p107 = scmp.eq.s32.totalorder %s24, 0
      %p108 = por %p106, %p107
      %p109 = scmp.ne.s32.totalorder %s97, %s98
      %p110 = scmp.eq.s32.totalorder %s25, 1
      %p111 = por %p109, %p110
      %p113 = scmp.ne.s32.totalorder %s98, %s112
      %p114 = scmp.eq.s32.totalorder %s25, 0
      %p115 = por %p113, %p114
      %s117 = sadd.s32 %s116, 1
      %p120 = scmp.eq.s32.totalorder %s19, 1
      %p121 = scmp.ne.s32.totalorder %s116, %s118
      %p122 = scmp.eq.s32.totalorder %s19, 0
      %p123 = por %p121, %p122
      %p124 = scmp.ne.s32.totalorder %s116, %s118
      %p125 = scmp.eq.s32.totalorder %s24, 1
      %p126 = por %p124, %p125
      %p127 = scmp.ne.s32.totalorder %s118, %s119
      %p128 = scmp.eq.s32.totalorder %s24, 0
      %p129 = por %p127, %p128
      %p130 = scmp.ne.s32.totalorder %s118, %s119
      %p131 = scmp.eq.s32.totalorder %s25, 1
      %p132 = por %p130, %p131
      %p134 = scmp.ne.s32.totalorder %s119, %s133
      %p135 = scmp.eq.s32.totalorder %s25, 0
      %p136 = por %p134, %p135
      %s137 = ssub.s32 %s19, %s26
      %p138 = scmp.eq.s32.totalorder %s137, 0
      %s140 = sadd.s32 %s139, 1
      %s141 = scalar_select %p138, %s139, %s140
      %p144 = pneg %p138
      %p145 = scmp.eq.s32.totalorder %s19, 1
      %p146 = por %p144, %p145
      %p147 = scmp.ne.s32.totalorder %s139, %s142
      %p148 = scmp.eq.s32.totalorder %s19, 0
      %p149 = por %p147, %p148
      %p150 = scmp.ne.s32.totalorder %s139, %s142
      %p151 = scmp.eq.s32.totalorder %s24, 1
      %p152 = por %p150, %p151
      %p153 = scmp.ne.s32.totalorder %s142, %s143
      %p154 = scmp.eq.s32.totalorder %s24, 0
      %p155 = por %p153, %p154
      %p156 = scmp.ne.s32.totalorder %s142, %s143
      %p157 = scmp.eq.s32.totalorder %s25, 1
      %p158 = por %p156, %p157
      %p160 = scmp.ne.s32.totalorder %s143, %s159
      %p161 = scmp.eq.s32.totalorder %s25, 0
      %p162 = por %p160, %p161
      %p163 = scmp.le.s32.totalorder 1, %s19
      %p164 = scmp.lt.s32.totalorder %s19, 3
      %p165 = pnand %p163, %p164
      %p166 = pneg %p165
      // Predicated region
      $region9: #{tpu_custom_call.1} parent=5 // pred_check
        _
      $region10: #{tpu_custom_call.1} parent=5 // pred_check_branch
        %168 = sbr.rel (%p165) target = $region12
      $region11: #{tpu_custom_call.1} parent=5 // pred_region
        %s169 = ssub.s32 %s19, 1
        // Predicated region
        $region13: #{tpu_custom_call.1} parent=11 // pred_check
          %p170 = pneg %p66
        $region14: #{tpu_custom_call.1} parent=11 // pred_check_branch
          %172 = sbr.rel (%p170) target = $region16
        $region15: #{tpu_custom_call.1} parent=11 // pred_region
          %s174 = ssub.s32 512, 512
          %175 = vsyncadd [#allocation7], %s174
          %s176 = sshll.u32 [#allocation6], 4
          %s177 = int_to_ptr.vmem [resolvable:$true] %s176
          %182 = dma.hbm_to_vmem [thread:$0]  %s1, 512, %s177, [#allocation7], 128, 128, 8
        $region16: #{tpu_custom_call.1} parent=11 // pred_fallthru
          _
        // Predicated region
        $region17: #{tpu_custom_call.1} parent=11 // pred_check
          %p183 = pneg %p87
        $region18: #{tpu_custom_call.1} parent=11 // pred_check_branch
          %185 = sbr.rel (%p183) target = $region20
        $region19: #{tpu_custom_call.1} parent=11 // pred_region
          _
        $region20: #{tpu_custom_call.1} parent=11 // pred_fallthru
          _
        // Predicated region
        $region21: #{tpu_custom_call.1} parent=11 // pred_check
          %p186 = pneg %p108
        $region22: #{tpu_custom_call.1} parent=11 // pred_check_branch
          %188 = sbr.rel (%p186) target = $region24
        $region23: #{tpu_custom_call.1} parent=11 // pred_region
          _
        $region24: #{tpu_custom_call.1} parent=11 // pred_fallthru
          _
        // Predicated region
        $region25: #{tpu_custom_call.1} parent=11 // pred_check
          %p189 = pneg %p129
        $region26: #{tpu_custom_call.1} parent=11 // pred_check_branch
          %191 = sbr.rel (%p189) target = $region28
        $region27: #{tpu_custom_call.1} parent=11 // pred_region
          _
        $region28: #{tpu_custom_call.1} parent=11 // pred_fallthru
          _
      $region12: #{tpu_custom_call.1} parent=5 // pred_fallthru
        _
      %p192 = scmp.lt.s32.totalorder %s19, 2
      // Predicated region
      $region29: #{tpu_custom_call.1} parent=5 // pred_check
        %p193 = pneg %p192
      $region30: #{tpu_custom_call.1} parent=5 // pred_check_branch
        %195 = sbr.rel (%p193) target = $region32
      $region31: #{tpu_custom_call.1} parent=5 // pred_region
        // Predicated region
        $region33: #{tpu_custom_call.1} parent=31 // pred_check
          %p196 = pneg %p39
        $region34: #{tpu_custom_call.1} parent=31 // pred_check_branch
          %198 = sbr.rel (%p196) target = $region36
        $region35: #{tpu_custom_call.1} parent=31 // pred_region
          %s199 = sand.u32 %s29, 1
          %s200 = scalar_lea.sflag [#allocation4], %s199
          %s201 = sand.u32 %s29, 1
          %s202 = smul.addr %s201, 128
          %s203 = scalar_lea.vmem [#allocation3], %s202
          %s204 = smul.u32 8, %s19
          %s206 = ssub.s32 2048, 2048
          %207 = vsyncadd %s200, %s206
          %s208 = smul.addr %s204, 2
          %s209 = smul.addr %s208, 128
          %s210 = scalar_lea.hbm %s0, %s209
          %s211 = sshll.u32 %s203, 4
          %s212 = int_to_ptr.vmem [resolvable:$true] %s211
          %217 = dma.hbm_to_vmem [thread:$0]  %s210, 2048, %s212, %s200, 128, 128, 8
        $region36: #{tpu_custom_call.1} parent=31 // pred_fallthru
          _
      $region32: #{tpu_custom_call.1} parent=5 // pred_fallthru
        _
      %p218 = scmp.le.s32.totalorder 1, %s19
      %p219 = scmp.lt.s32.totalorder %s19, 3
      %p220 = pnand %p218, %p219
      %p221 = pneg %p220
      // Predicated region
      $region37: #{tpu_custom_call.1} parent=5 // pred_check
        _
      $region38: #{tpu_custom_call.1} parent=5 // pred_check_branch
        %223 = sbr.rel (%p220) target = $region40
      $region39: #{tpu_custom_call.1} parent=5 // pred_region
        %s224 = ssub.s32 %s19, 1
        %s225 = sand.u32 %s32, 1
        %s226 = scalar_lea.sflag [#allocation4], %s225
        %s227 = sand.u32 %s32, 1
        %s228 = smul.addr %s227, 128
        %s229 = scalar_lea.vmem [#allocation3], %s228
        // Predicated region
        $region41: #{tpu_custom_call.1} parent=39 // pred_check
          %p230 = pneg %p45
        $region42: #{tpu_custom_call.1} parent=39 // pred_check_branch
          %232 = sbr.rel (%p230) target = $region44
        $region43: #{tpu_custom_call.1} parent=39 // pred_region
          %233 = dma.done %s226, 2048
        $region44: #{tpu_custom_call.1} parent=39 // pred_fallthru
          _
        // Predicated region
        $region45: #{tpu_custom_call.1} parent=39 // pred_check
          %p234 = pneg %p66
        $region46: #{tpu_custom_call.1} parent=39 // pred_check_branch
          %236 = sbr.rel (%p234) target = $region48
        $region47: #{tpu_custom_call.1} parent=39 // pred_region
          %237 = dma.done [#allocation7], 512
        $region48: #{tpu_custom_call.1} parent=39 // pred_fallthru
          _
        %s238 = sand.u32 %s32, 1
        %s239 = scalar_lea.sflag [#allocation4], %s238
        %s240 = sand.u32 %s32, 1
        %s241 = smul.addr %s240, 128
        %s242 = scalar_lea.vmem [#allocation3], %s241
        %p243 = pneg %p45
        %p244 = pneg %p42
        %p245 = pneg %p66
        %p246 = pneg %p63
        %p247 = pneg %p87
        %p248 = pneg %p84
        %p249 = pneg %p108
        %p250 = pneg %p105
        %p251 = pneg %p129
        %p252 = pneg %p126
        %p253 = pneg %p155
        %p254 = pneg %p152
        %s255 = sand.u32 %s142, 1
        %s256 = scalar_lea.sflag [#allocation5], %s255
        %s257 = sand.u32 %s142, 1
        %s258 = smul.addr %s257, 8
        %s259 = scalar_lea.vmem [#allocation8], %s258
        %s260 = smul.u32 8, %s24
        %v261 = vld [vmem:[%s229] sm:$0xff]
        %v262 = vld [vmem:[%s229 + $0x8] sm:$0xff]
        %v263 = vld [vmem:[%s229 + $0x10] sm:$0xff]
        %v264 = vld [vmem:[%s229 + $0x18] sm:$0xff]
        %v265 = vld [vmem:[%s229 + $0x20] sm:$0xff]
        %v266 = vld [vmem:[%s229 + $0x28] sm:$0xff]
        %v267 = vld [vmem:[%s229 + $0x30] sm:$0xff]
        %v268 = vld [vmem:[%s229 + $0x38] sm:$0xff]
        %v269 = vld [vmem:[%s229 + $0x40] sm:$0xff]
        %v270 = vld [vmem:[%s229 + $0x48] sm:$0xff]
        %v271 = vld [vmem:[%s229 + $0x50] sm:$0xff]
        %v272 = vld [vmem:[%s229 + $0x58] sm:$0xff]
        %v273 = vld [vmem:[%s229 + $0x60] sm:$0xff]
        %v274 = vld [vmem:[%s229 + $0x68] sm:$0xff]
        %v275 = vld [vmem:[%s229 + $0x70] sm:$0xff]
        %v276 = vld [vmem:[%s229 + $0x78] sm:$0xff]
        %v277 = vld [vmem:[#allocation6] sm:$0xff]
        %v278 = vld [vmem:[#allocation6 + $0x8] sm:$0xff]
        %v279 = vld [vmem:[#allocation6 + $0x10] sm:$0xff]
        %v280 = vld [vmem:[#allocation6 + $0x18] sm:$0xff]
        %v281 = vld [vmem:[%s2] sm:$0x1]
        %v283 = vlaneseq
        %v284 = vshrl.u32 %v283, 7
        %v285 = vsub.s32 0, %v284
        %v286 = vrot.slane %v281, %v285
        %vm288 = vcmask 261120
        %v290 = vsel %vm288, %v261, 0
        %v293 = vsel %vm288, %v262, 0
        %v296 = vsel %vm288, %v263, 0
        %v299 = vsel %vm288, %v264, 0
        %v302 = vsel %vm288, %v265, 0
        %v305 = vsel %vm288, %v266, 0
        %v308 = vsel %vm288, %v267, 0
        %v311 = vsel %vm288, %v268, 0
        %v314 = vsel %vm288, %v269, 0
        %v317 = vsel %vm288, %v270, 0
        %v320 = vsel %vm288, %v271, 0
        %v323 = vsel %vm288, %v272, 0
        %v326 = vsel %vm288, %v273, 0
        %v329 = vsel %vm288, %v274, 0
        %v332 = vsel %vm288, %v275, 0
        %v335 = vsel %vm288, %v276, 0
        %337 = vmatprep.subr.mxu0 0.0
        %338 = vmatpush1.msra.mxu0 0.0
        %339 = vmatprep.subr.mxu0 0.0
        %340 = vmatpush1.msra.mxu0 0.0
        %341 = vmatprep.subr.mxu0 0.0
        %342 = vmatpush1.msra.mxu0 0.0
        %343 = vmatprep.subr.mxu0 0.0
        %344 = vmatpush1.msra.mxu0 0.0
        %345 = vmatprep.subr.mxu0 0.0
        %346 = vmatpush1.msra.mxu0 0.0
        %347 = vmatprep.subr.mxu0 0.0
        %348 = vmatpush1.msra.mxu0 0.0
        %349 = vmatprep.subr.mxu0 0.0
        %350 = vmatpush1.msra.mxu0 0.0
        %351 = vmatprep.subr.mxu0 0.0
        %352 = vmatpush1.msra.mxu0 0.0
        %353 = vmatprep.subr.mxu0 0.0
        %354 = vmatpush1.msra.mxu0 0.0
        %355 = vmatprep.subr.mxu0 0.0
        %356 = vmatpush1.msra.mxu0 0.0
        %357 = vmatprep.subr.mxu0 0.0
        %358 = vmatpush1.msra.mxu0 0.0
        %359 = vmatprep.subr.mxu0 0.0
        %360 = vmatpush1.msra.mxu0 0.0
        %361 = vmatprep.subr.mxu0 0.0
        %362 = vmatpush1.msra.mxu0 %v280
        %363 = vmatprep.subr.mxu0 0.0
        %364 = vmatpush1.msra.mxu0 %v279
        %365 = vmatprep.subr.mxu0 0.0
        %366 = vmatpush1.msra.mxu0 %v278
        %367 = vmatprep.subr.mxu0 0.0
        %368 = vmatpush1.msra.mxu0 %v277
        %369 = vmatprep.subr.mxu0 0.0
        %370 = vmatpush2.msra.mxu0 0.0
        %371 = vmatprep.subr.mxu0 0.0
        %372 = vmatpush2.msra.mxu0 0.0
        %373 = vmatprep.subr.mxu0 0.0
        %374 = vmatpush2.msra.mxu0 0.0
        %375 = vmatprep.subr.mxu0 0.0
        %376 = vmatpush2.msra.mxu0 0.0
        %377 = vmatprep.subr.mxu0 0.0
        %378 = vmatpush2.msra.mxu0 0.0
        %379 = vmatprep.subr.mxu0 0.0
        %380 = vmatpush2.msra.mxu0 0.0
        %381 = vmatprep.subr.mxu0 0.0
        %382 = vmatpush2.msra.mxu0 0.0
        %383 = vmatprep.subr.mxu0 0.0
        %384 = vmatpush2.msra.mxu0 0.0
        %385 = vmatprep.subr.mxu0 0.0
        %386 = vmatpush2.msra.mxu0 0.0
        %387 = vmatprep.subr.mxu0 0.0
        %388 = vmatpush2.msra.mxu0 0.0
        %389 = vmatprep.subr.mxu0 0.0
        %390 = vmatpush2.msra.mxu0 0.0
        %391 = vmatprep.subr.mxu0 0.0
        %392 = vmatpush2.msra.mxu0 0.0
        %393 = vmatprep.subr.mxu0 0.0
        %394 = vmatpush2.msra.mxu0 0.0
        %395 = vmatprep.subr.mxu0 0.0
        %396 = vmatpush2.msra.mxu0 0.0
        %397 = vmatprep.subr.mxu0 0.0
        %398 = vmatpush2.msra.mxu0 0.0
        %399 = vmatprep.subr.mxu0 0.0
        %400 = vmatpush2.msra.mxu0 0.0
        %401 = vmatprep.mubr.f32.mxu0 0.0
        %402 = vmatmul.mubr.f32.gmra.mxu0 %v290
        %v403 = vpop.f32.mrf.mxu0
        %v404 = vadd.f32 %v286, %v403
        %v405 = vpop.f32.mrf.mxu0
        %406 = vmatprep.mubr.f32.mxu0 0.0
        %407 = vmatmul.mubr.f32.gmra.mxu0 %v293
        %v408 = vpop.f32.mrf.mxu0
        %v409 = vadd.f32 %v286, %v408
        %v410 = vpop.f32.mrf.mxu0
        %411 = vmatprep.mubr.f32.mxu0 0.0
        %412 = vmatmul.mubr.f32.gmra.mxu0 %v296
        %v413 = vpop.f32.mrf.mxu0
        %v414 = vadd.f32 %v286, %v413
        %v415 = vpop.f32.mrf.mxu0
        %416 = vmatprep.mubr.f32.mxu0 0.0
        %417 = vmatmul.mubr.f32.gmra.mxu0 %v299
        %v418 = vpop.f32.mrf.mxu0
        %v419 = vadd.f32 %v286, %v418
        %v420 = vpop.f32.mrf.mxu0
        %421 = vmatprep.mubr.f32.mxu0 0.0
        %422 = vmatmul.mubr.f32.gmra.mxu0 %v302
        %v423 = vpop.f32.mrf.mxu0
        %v424 = vadd.f32 %v286, %v423
        %v425 = vpop.f32.mrf.mxu0
        %426 = vmatprep.mubr.f32.mxu0 0.0
        %427 = vmatmul.mubr.f32.gmra.mxu0 %v305
        %v428 = vpop.f32.mrf.mxu0
        %v429 = vadd.f32 %v286, %v428
        %v430 = vpop.f32.mrf.mxu0
        %431 = vmatprep.mubr.f32.mxu0 0.0
        %432 = vmatmul.mubr.f32.gmra.mxu0 %v308
        %v433 = vpop.f32.mrf.mxu0
        %v434 = vadd.f32 %v286, %v433
        %v435 = vpop.f32.mrf.mxu0
        %436 = vmatprep.mubr.f32.mxu0 0.0
        %437 = vmatmul.mubr.f32.gmra.mxu0 %v311
        %v438 = vpop.f32.mrf.mxu0
        %v439 = vadd.f32 %v286, %v438
        %v440 = vpop.f32.mrf.mxu0
        %441 = vmatprep.mubr.f32.mxu0 0.0
        %442 = vmatmul.mubr.f32.gmra.mxu0 %v314
        %v443 = vpop.f32.mrf.mxu0
        %v444 = vadd.f32 %v286, %v443
        %v445 = vpop.f32.mrf.mxu0
        %446 = vmatprep.mubr.f32.mxu0 0.0
        %447 = vmatmul.mubr.f32.gmra.mxu0 %v317
        %v448 = vpop.f32.mrf.mxu0
        %v449 = vadd.f32 %v286, %v448
        %v450 = vpop.f32.mrf.mxu0
        %451 = vmatprep.mubr.f32.mxu0 0.0
        %452 = vmatmul.mubr.f32.gmra.mxu0 %v320
        %v453 = vpop.f32.mrf.mxu0
        %v454 = vadd.f32 %v286, %v453
        %v455 = vpop.f32.mrf.mxu0
        %456 = vmatprep.mubr.f32.mxu0 0.0
        %457 = vmatmul.mubr.f32.gmra.mxu0 %v323
        %v458 = vpop.f32.mrf.mxu0
        %v459 = vadd.f32 %v286, %v458
        %v460 = vpop.f32.mrf.mxu0
        %461 = vmatprep.mubr.f32.mxu0 0.0
        %462 = vmatmul.mubr.f32.gmra.mxu0 %v326
        %v463 = vpop.f32.mrf.mxu0
        %v464 = vadd.f32 %v286, %v463
        %v465 = vpop.f32.mrf.mxu0
        %466 = vmatprep.mubr.f32.mxu0 0.0
        %467 = vmatmul.mubr.f32.gmra.mxu0 %v329
        %v468 = vpop.f32.mrf.mxu0
        %v469 = vadd.f32 %v286, %v468
        %v470 = vpop.f32.mrf.mxu0
        %471 = vmatprep.mubr.f32.mxu0 0.0
        %472 = vmatmul.mubr.f32.gmra.mxu0 %v332
        %v473 = vpop.f32.mrf.mxu0
        %v474 = vadd.f32 %v286, %v473
        %v475 = vpop.f32.mrf.mxu0
        %476 = vmatprep.mubr.f32.mxu0 0.0
        %477 = vmatmul.mubr.f32.gmra.mxu0 %v335
        %v478 = vpop.f32.mrf.mxu0
        %v479 = vadd.f32 %v286, %v478
        %v480 = vpop.f32.mrf.mxu0
        %481 = vdwg.mxu0
        %v482 = vtanh.pop %v404
        %v483 = vtanh.pop %v409
        %v484 = vtanh.pop %v414
        %v485 = vtanh.pop %v419
        %v486 = vtanh.pop %v424
        %v487 = vtanh.pop %v429
        %v488 = vtanh.pop %v434
        %v489 = vtanh.pop %v439
        %v490 = vtanh.pop %v444
        %v491 = vtanh.pop %v449
        %v492 = vtanh.pop %v454
        %v493 = vtanh.pop %v459
        %v494 = vtanh.pop %v464
        %v495 = vtanh.pop %v469
        %v496 = vtanh.pop %v474
        %v497 = vtanh.pop %v479
        %v498 = vxor.u32 %v404, 2147483648
        %v499 = vxor.u32 %v409, 2147483648
        %v500 = vxor.u32 %v414, 2147483648
        %v501 = vxor.u32 %v419, 2147483648
        %v502 = vxor.u32 %v424, 2147483648
        %v503 = vxor.u32 %v429, 2147483648
        %v504 = vxor.u32 %v434, 2147483648
        %v505 = vxor.u32 %v439, 2147483648
        %v506 = vxor.u32 %v444, 2147483648
        %v507 = vxor.u32 %v449, 2147483648
        %v508 = vxor.u32 %v454, 2147483648
        %v509 = vxor.u32 %v459, 2147483648
        %v510 = vxor.u32 %v464, 2147483648
        %v511 = vxor.u32 %v469, 2147483648
        %v512 = vxor.u32 %v474, 2147483648
        %v513 = vxor.u32 %v479, 2147483648
        %v514 = vmul.f32 %v498, 1.442695
        %v515 = vpow.pop %v514
        %v516 = vmul.f32 %v499, 1.442695
        %v517 = vpow.pop %v516
        %v518 = vmul.f32 %v500, 1.442695
        %v519 = vpow.pop %v518
        %v520 = vmul.f32 %v501, 1.442695
        %v521 = vpow.pop %v520
        %v522 = vmul.f32 %v502, 1.442695
        %v523 = vpow.pop %v522
        %v524 = vmul.f32 %v503, 1.442695
        %v525 = vpow.pop %v524
        %v526 = vmul.f32 %v504, 1.442695
        %v527 = vpow.pop %v526
        %v528 = vmul.f32 %v505, 1.442695
        %v529 = vpow.pop %v528
        %v530 = vmul.f32 %v506, 1.442695
        %v531 = vpow.pop %v530
        %v532 = vmul.f32 %v507, 1.442695
        %v533 = vpow.pop %v532
        %v534 = vmul.f32 %v508, 1.442695
        %v535 = vpow.pop %v534
        %v536 = vmul.f32 %v509, 1.442695
        %v537 = vpow.pop %v536
        %v538 = vmul.f32 %v510, 1.442695
        %v539 = vpow.pop %v538
        %v540 = vmul.f32 %v511, 1.442695
        %v541 = vpow.pop %v540
        %v542 = vmul.f32 %v512, 1.442695
        %v543 = vpow.pop %v542
        %v544 = vmul.f32 %v513, 1.442695
        %v545 = vpow.pop %v544
        %v546 = vadd.f32 %v515, 1.0
        %v547 = vadd.f32 %v517, 1.0
        %v548 = vadd.f32 %v519, 1.0
        %v549 = vadd.f32 %v521, 1.0
        %v550 = vadd.f32 %v523, 1.0
        %v551 = vadd.f32 %v525, 1.0
        %v552 = vadd.f32 %v527, 1.0
        %v553 = vadd.f32 %v529, 1.0
        %v554 = vadd.f32 %v531, 1.0
        %v555 = vadd.f32 %v533, 1.0
        %v556 = vadd.f32 %v535, 1.0
        %v557 = vadd.f32 %v537, 1.0
        %v558 = vadd.f32 %v539, 1.0
        %v559 = vadd.f32 %v541, 1.0
        %v560 = vadd.f32 %v543, 1.0
        %v561 = vadd.f32 %v545, 1.0
        %v562 = vrcp.pop %v546
        %v563 = vmul.f32 1.0, %v562
        %v564 = vrcp.pop %v547
        %v565 = vmul.f32 1.0, %v564
        %v566 = vrcp.pop %v548
        %v567 = vmul.f32 1.0, %v566
        %v568 = vrcp.pop %v549
        %v569 = vmul.f32 1.0, %v568
        %v570 = vrcp.pop %v550
        %v571 = vmul.f32 1.0, %v570
        %v572 = vrcp.pop %v551
        %v573 = vmul.f32 1.0, %v572
        %v574 = vrcp.pop %v552
        %v575 = vmul.f32 1.0, %v574
        %v576 = vrcp.pop %v553
        %v577 = vmul.f32 1.0, %v576
        %v578 = vrcp.pop %v554
        %v579 = vmul.f32 1.0, %v578
        %v580 = vrcp.pop %v555
        %v581 = vmul.f32 1.0, %v580
        %v582 = vrcp.pop %v556
        %v583 = vmul.f32 1.0, %v582
        %v584 = vrcp.pop %v557
        %v585 = vmul.f32 1.0, %v584
        %v586 = vrcp.pop %v558
        %v587 = vmul.f32 1.0, %v586
        %v588 = vrcp.pop %v559
        %v589 = vmul.f32 1.0, %v588
        %v590 = vrcp.pop %v560
        %v591 = vmul.f32 1.0, %v590
        %v592 = vrcp.pop %v561
        %v593 = vmul.f32 1.0, %v592
        %610 = vrot.lane.b32.xlu0 %v563, 96
        %v611 = vpop.permute.xlu0 %610
        %612 = vrot.lane.b32.xlu0 %v565, 96
        %v613 = vpop.permute.xlu0 %612
        %614 = vrot.lane.b32.xlu0 %v567, 96
        %v615 = vpop.permute.xlu0 %614
        %616 = vrot.lane.b32.xlu0 %v569, 96
        %v617 = vpop.permute.xlu0 %616
        %618 = vrot.lane.b32.xlu0 %v571, 96
        %v619 = vpop.permute.xlu0 %618
        %620 = vrot.lane.b32.xlu0 %v573, 96
        %v621 = vpop.permute.xlu0 %620
        %622 = vrot.lane.b32.xlu0 %v575, 96
        %v623 = vpop.permute.xlu0 %622
        %624 = vrot.lane.b32.xlu0 %v577, 96
        %v625 = vpop.permute.xlu0 %624
        %626 = vrot.lane.b32.xlu0 %v579, 96
        %v627 = vpop.permute.xlu0 %626
        %628 = vrot.lane.b32.xlu0 %v581, 96
        %v629 = vpop.permute.xlu0 %628
        %630 = vrot.lane.b32.xlu0 %v583, 96
        %v631 = vpop.permute.xlu0 %630
        %632 = vrot.lane.b32.xlu0 %v585, 96
        %v633 = vpop.permute.xlu0 %632
        %634 = vrot.lane.b32.xlu0 %v587, 96
        %v635 = vpop.permute.xlu0 %634
        %636 = vrot.lane.b32.xlu0 %v589, 96
        %v637 = vpop.permute.xlu0 %636
        %638 = vrot.lane.b32.xlu0 %v591, 96
        %v639 = vpop.permute.xlu0 %638
        %640 = vrot.lane.b32.xlu0 %v593, 96
        %v641 = vpop.permute.xlu0 %640
        %v658 = vmul.f32 %v482, %v611
        %v659 = vmul.f32 %v483, %v613
        %v660 = vmul.f32 %v484, %v615
        %v661 = vmul.f32 %v485, %v617
        %v662 = vmul.f32 %v486, %v619
        %v663 = vmul.f32 %v487, %v621
        %v664 = vmul.f32 %v488, %v623
        %v665 = vmul.f32 %v489, %v625
        %v666 = vmul.f32 %v490, %v627
        %v667 = vmul.f32 %v491, %v629
        %v668 = vmul.f32 %v492, %v631
        %v669 = vmul.f32 %v493, %v633
        %v670 = vmul.f32 %v494, %v635
        %v671 = vmul.f32 %v495, %v637
        %v672 = vmul.f32 %v496, %v639
        %v673 = vmul.f32 %v497, %v641
        %v674 = vld [vmem:[%s3] sm:$0x1]
        %v676 = vlaneseq
        %v677 = vshrl.u32 %v676, 7
        %v678 = vsub.s32 0, %v677
        %v679 = vrot.slane %v674, %v678
        %v681 = vmul.f32 %v658, %v679
        %v682 = vmul.f32 %v659, %v679
        %v683 = vmul.f32 %v660, %v679
        %v684 = vmul.f32 %v661, %v679
        %v685 = vmul.f32 %v662, %v679
        %v686 = vmul.f32 %v663, %v679
        %v687 = vmul.f32 %v664, %v679
        %v688 = vmul.f32 %v665, %v679
        %v689 = vmul.f32 %v666, %v679
        %v690 = vmul.f32 %v667, %v679
        %v691 = vmul.f32 %v668, %v679
        %v692 = vmul.f32 %v669, %v679
        %v693 = vmul.f32 %v670, %v679
        %v694 = vmul.f32 %v671, %v679
        %v695 = vmul.f32 %v672, %v679
        %v696 = vmul.f32 %v673, %v679
        %v697 = vsel %vm288, %v681, 0.0
        %698 = vadd.xlane.f32.xlu0 %v697
        %v699 = vpop.xlane.xlu0 %698
        %v700 = vsel %vm288, %v682, 0.0
        %701 = vadd.xlane.f32.xlu0 %v700
        %v702 = vpop.xlane.xlu0 %701
        %v703 = vsel %vm288, %v683, 0.0
        %704 = vadd.xlane.f32.xlu0 %v703
        %v705 = vpop.xlane.xlu0 %704
        %v706 = vsel %vm288, %v684, 0.0
        %707 = vadd.xlane.f32.xlu0 %v706
        %v708 = vpop.xlane.xlu0 %707
        %v709 = vsel %vm288, %v685, 0.0
        %710 = vadd.xlane.f32.xlu0 %v709
        %v711 = vpop.xlane.xlu0 %710
        %v712 = vsel %vm288, %v686, 0.0
        %713 = vadd.xlane.f32.xlu0 %v712
        %v714 = vpop.xlane.xlu0 %713
        %v715 = vsel %vm288, %v687, 0.0
        %716 = vadd.xlane.f32.xlu0 %v715
        %v717 = vpop.xlane.xlu0 %716
        %v718 = vsel %vm288, %v688, 0.0
        %719 = vadd.xlane.f32.xlu0 %v718
        %v720 = vpop.xlane.xlu0 %719
        %v721 = vsel %vm288, %v689, 0.0
        %722 = vadd.xlane.f32.xlu0 %v721
        %v723 = vpop.xlane.xlu0 %722
        %v724 = vsel %vm288, %v690, 0.0
        %725 = vadd.xlane.f32.xlu0 %v724
        %v726 = vpop.xlane.xlu0 %725
        %v727 = vsel %vm288, %v691, 0.0
        %728 = vadd.xlane.f32.xlu0 %v727
        %v729 = vpop.xlane.xlu0 %728
        %v730 = vsel %vm288, %v692, 0.0
        %731 = vadd.xlane.f32.xlu0 %v730
        %v732 = vpop.xlane.xlu0 %731
        %v733 = vsel %vm288, %v693, 0.0
        %734 = vadd.xlane.f32.xlu0 %v733
        %v735 = vpop.xlane.xlu0 %734
        %v736 = vsel %vm288, %v694, 0.0
        %737 = vadd.xlane.f32.xlu0 %v736
        %v738 = vpop.xlane.xlu0 %737
        %v739 = vsel %vm288, %v695, 0.0
        %740 = vadd.xlane.f32.xlu0 %v739
        %v741 = vpop.xlane.xlu0 %740
        %v742 = vsel %vm288, %v696, 0.0
        %743 = vadd.xlane.f32.xlu0 %v742
        %v744 = vpop.xlane.xlu0 %743
        %s745 = sld [smem:[#allocation2]]
        %v746 = vstv %s745
        %v747 = vadd.f32 %v699, %v746
        %v748 = vadd.f32 %v702, %v746
        %v749 = vadd.f32 %v705, %v746
        %v750 = vadd.f32 %v708, %v746
        %v751 = vadd.f32 %v711, %v746
        %v752 = vadd.f32 %v714, %v746
        %v753 = vadd.f32 %v717, %v746
        %v754 = vadd.f32 %v720, %v746
        %v755 = vadd.f32 %v723, %v746
        %v756 = vadd.f32 %v726, %v746
        %v757 = vadd.f32 %v729, %v746
        %v758 = vadd.f32 %v732, %v746
        %v759 = vadd.f32 %v735, %v746
        %v760 = vadd.f32 %v738, %v746
        %v761 = vadd.f32 %v741, %v746
        %v762 = vadd.f32 %v744, %v746
        %v779 = vlaneseq
        %v780 = vand.u32 %v779, 127
        %v781 = vlaneseq
        %v782 = vshrl.u32 %v781, 7
        %v783 = vsub.s32 %v780, %v782
        %v784 = vrot.slane %v747, %v783
        %v785 = vadd.s32 %v780, 4294967288
        %v786 = vlaneseq
        %v787 = vshrl.u32 %v786, 7
        %v788 = vsub.s32 %v785, %v787
        %v789 = vrot.slane %v748, %v788
        %vm790 = vcmask 130112
        %v791 = vsel %vm790, %v789, %v784
        %v792 = vlaneseq
        %v793 = vshrl.u32 %v792, 7
        %v794 = vsub.s32 %v780, %v793
        %v795 = vrot.slane %v749, %v794
        %v796 = vlaneseq
        %v797 = vshrl.u32 %v796, 7
        %v798 = vsub.s32 %v785, %v797
        %v799 = vrot.slane %v750, %v798
        %v800 = vsel %vm790, %v799, %v795
        %v801 = vlaneseq
        %v802 = vshrl.u32 %v801, 7
        %v803 = vsub.s32 %v780, %v802
        %v804 = vrot.slane %v751, %v803
        %v805 = vlaneseq
        %v806 = vshrl.u32 %v805, 7
        %v807 = vsub.s32 %v785, %v806
        %v808 = vrot.slane %v752, %v807
        %v809 = vsel %vm790, %v808, %v804
        %v810 = vlaneseq
        %v811 = vshrl.u32 %v810, 7
        %v812 = vsub.s32 %v780, %v811
        %v813 = vrot.slane %v753, %v812
        %v814 = vlaneseq
        %v815 = vshrl.u32 %v814, 7
        %v816 = vsub.s32 %v785, %v815
        %v817 = vrot.slane %v754, %v816
        %v818 = vsel %vm790, %v817, %v813
        %v819 = vlaneseq
        %v820 = vshrl.u32 %v819, 7
        %v821 = vsub.s32 %v780, %v820
        %v822 = vrot.slane %v755, %v821
        %v823 = vlaneseq
        %v824 = vshrl.u32 %v823, 7
        %v825 = vsub.s32 %v785, %v824
        %v826 = vrot.slane %v756, %v825
        %v827 = vsel %vm790, %v826, %v822
        %v828 = vlaneseq
        %v829 = vshrl.u32 %v828, 7
        %v830 = vsub.s32 %v780, %v829
        %v831 = vrot.slane %v757, %v830
        %v832 = vlaneseq
        %v833 = vshrl.u32 %v832, 7
        %v834 = vsub.s32 %v785, %v833
        %v835 = vrot.slane %v758, %v834
        %v836 = vsel %vm790, %v835, %v831
        %v837 = vlaneseq
        %v838 = vshrl.u32 %v837, 7
        %v839 = vsub.s32 %v780, %v838
        %v840 = vrot.slane %v759, %v839
        %v841 = vlaneseq
        %v842 = vshrl.u32 %v841, 7
        %v843 = vsub.s32 %v785, %v842
        %v844 = vrot.slane %v760, %v843
        %v845 = vsel %vm790, %v844, %v840
        %v846 = vlaneseq
        %v847 = vshrl.u32 %v846, 7
        %v848 = vsub.s32 %v780, %v847
        %v849 = vrot.slane %v761, %v848
        %v850 = vlaneseq
        %v851 = vshrl.u32 %v850, 7
        %v852 = vsub.s32 %v785, %v851
        %v853 = vrot.slane %v762, %v852
        %v854 = vsel %vm790, %v853, %v849
        %vm855 = vcmask 1041409
        %v856 = vsel %vm855, %v800, %v791
        %vm857 = vcmask 1042434
        %v858 = vsel %vm857, %v809, %v856
        %vm859 = vcmask 1043459
        %v860 = vsel %vm859, %v818, %v858
        %vm861 = vcmask 1044484
        %v862 = vsel %vm861, %v827, %v860
        %vm863 = vcmask 1045509
        %v864 = vsel %vm863, %v836, %v862
        %vm865 = vcmask 1046534
        %v866 = vsel %vm865, %v845, %v864
        %vm867 = vcmask 1047559
        %v868 = vsel %vm867, %v854, %v866
        %vm870 = vcmask 130048
        %v871 = vsel %vm870, %v868, -inf
        %872 = vmax.xlane.f32.xlu0 %v871
        %v873 = vpop.xlane.xlu0 %872
        %v875 = vlaneseq
        %v876 = vshrl.u32 %v875, 7
        %v877 = vsub.s32 0, %v876
        %v878 = vrot.slane %v873, %v877
        %v879 = vlaneseq
        %v880 = vshrl.u32 %v879, 7
        %v881 = vsub.s32 1, %v880
        %v882 = vrot.slane %v873, %v881
        %v883 = vlaneseq
        %v884 = vshrl.u32 %v883, 7
        %v885 = vsub.s32 2, %v884
        %v886 = vrot.slane %v873, %v885
        %v887 = vlaneseq
        %v888 = vshrl.u32 %v887, 7
        %v889 = vsub.s32 3, %v888
        %v890 = vrot.slane %v873, %v889
        %v891 = vlaneseq
        %v892 = vshrl.u32 %v891, 7
        %v893 = vsub.s32 4, %v892
        %v894 = vrot.slane %v873, %v893
        %v895 = vlaneseq
        %v896 = vshrl.u32 %v895, 7
        %v897 = vsub.s32 5, %v896
        %v898 = vrot.slane %v873, %v897
        %v899 = vlaneseq
        %v900 = vshrl.u32 %v899, 7
        %v901 = vsub.s32 6, %v900
        %v902 = vrot.slane %v873, %v901
        %v903 = vlaneseq
        %v904 = vshrl.u32 %v903, 7
        %v905 = vsub.s32 7, %v904
        %v906 = vrot.slane %v873, %v905
        %v915 = vsub.f32 %v747, %v878
        %v916 = vsub.f32 %v748, %v878
        %v917 = vsub.f32 %v749, %v882
        %v918 = vsub.f32 %v750, %v882
        %v919 = vsub.f32 %v751, %v886
        %v920 = vsub.f32 %v752, %v886
        %v921 = vsub.f32 %v753, %v890
        %v922 = vsub.f32 %v754, %v890
        %v923 = vsub.f32 %v755, %v894
        %v924 = vsub.f32 %v756, %v894
        %v925 = vsub.f32 %v757, %v898
        %v926 = vsub.f32 %v758, %v898
        %v927 = vsub.f32 %v759, %v902
        %v928 = vsub.f32 %v760, %v902
        %v929 = vsub.f32 %v761, %v906
        %v930 = vsub.f32 %v762, %v906
        %v931 = vmul.f32 %v915, 1.442695
        %v932 = vpow.pop %v931
        %v933 = vmul.f32 %v916, 1.442695
        %v934 = vpow.pop %v933
        %v935 = vmul.f32 %v917, 1.442695
        %v936 = vpow.pop %v935
        %v937 = vmul.f32 %v918, 1.442695
        %v938 = vpow.pop %v937
        %v939 = vmul.f32 %v919, 1.442695
        %v940 = vpow.pop %v939
        %v941 = vmul.f32 %v920, 1.442695
        %v942 = vpow.pop %v941
        %v943 = vmul.f32 %v921, 1.442695
        %v944 = vpow.pop %v943
        %v945 = vmul.f32 %v922, 1.442695
        %v946 = vpow.pop %v945
        %v947 = vmul.f32 %v923, 1.442695
        %v948 = vpow.pop %v947
        %v949 = vmul.f32 %v924, 1.442695
        %v950 = vpow.pop %v949
        %v951 = vmul.f32 %v925, 1.442695
        %v952 = vpow.pop %v951
        %v953 = vmul.f32 %v926, 1.442695
        %v954 = vpow.pop %v953
        %v955 = vmul.f32 %v927, 1.442695
        %v956 = vpow.pop %v955
        %v957 = vmul.f32 %v928, 1.442695
        %v958 = vpow.pop %v957
        %v959 = vmul.f32 %v929, 1.442695
        %v960 = vpow.pop %v959
        %v961 = vmul.f32 %v930, 1.442695
        %v962 = vpow.pop %v961
        %979 = vset.pattern.permute.xlu0 0
        %980 = vperm.xlu0 %979, %v932
        %v981 = vpop.permute.xlu0 %980
        %982 = vset.pattern.permute.xlu0 0
        %983 = vperm.xlu0 %982, %v934
        %v984 = vpop.permute.xlu0 %983
        %985 = vset.pattern.permute.xlu0 0
        %986 = vperm.xlu0 %985, %v936
        %v987 = vpop.permute.xlu0 %986
        %988 = vset.pattern.permute.xlu0 0
        %989 = vperm.xlu0 %988, %v938
        %v990 = vpop.permute.xlu0 %989
        %991 = vset.pattern.permute.xlu0 0
        %992 = vperm.xlu0 %991, %v940
        %v993 = vpop.permute.xlu0 %992
        %994 = vset.pattern.permute.xlu0 0
        %995 = vperm.xlu0 %994, %v942
        %v996 = vpop.permute.xlu0 %995
        %997 = vset.pattern.permute.xlu0 0
        %998 = vperm.xlu0 %997, %v944
        %v999 = vpop.permute.xlu0 %998
        %1000 = vset.pattern.permute.xlu0 0
        %1001 = vperm.xlu0 %1000, %v946
        %v1002 = vpop.permute.xlu0 %1001
        %1003 = vset.pattern.permute.xlu0 0
        %1004 = vperm.xlu0 %1003, %v948
        %v1005 = vpop.permute.xlu0 %1004
        %1006 = vset.pattern.permute.xlu0 0
        %1007 = vperm.xlu0 %1006, %v950
        %v1008 = vpop.permute.xlu0 %1007
        %1009 = vset.pattern.permute.xlu0 0
        %1010 = vperm.xlu0 %1009, %v952
        %v1011 = vpop.permute.xlu0 %1010
        %1012 = vset.pattern.permute.xlu0 0
        %1013 = vperm.xlu0 %1012, %v954
        %v1014 = vpop.permute.xlu0 %1013
        %1015 = vset.pattern.permute.xlu0 0
        %1016 = vperm.xlu0 %1015, %v956
        %v1017 = vpop.permute.xlu0 %1016
        %1018 = vset.pattern.permute.xlu0 0
        %1019 = vperm.xlu0 %1018, %v958
        %v1020 = vpop.permute.xlu0 %1019
        %1021 = vset.pattern.permute.xlu0 0
        %1022 = vperm.xlu0 %1021, %v960
        %v1023 = vpop.permute.xlu0 %1022
        %1024 = vset.pattern.permute.xlu0 0
        %1025 = vperm.xlu0 %1024, %v962
        %v1026 = vpop.permute.xlu0 %1025
        %v1027 = vlaneseq
        %v1028 = vshrl.u32 %v1027, 7
        %v1029 = vsub.s32 %v780, %v1028
        %v1030 = vrot.slane %v981, %v1029
        %v1031 = vlaneseq
        %v1032 = vshrl.u32 %v1031, 7
        %v1033 = vsub.s32 %v785, %v1032
        %v1034 = vrot.slane %v984, %v1033
        %v1035 = vsel %vm790, %v1034, %v1030
        %v1036 = vlaneseq
        %v1037 = vshrl.u32 %v1036, 7
        %v1038 = vsub.s32 %v780, %v1037
        %v1039 = vrot.slane %v987, %v1038
        %v1040 = vlaneseq
        %v1041 = vshrl.u32 %v1040, 7
        %v1042 = vsub.s32 %v785, %v1041
        %v1043 = vrot.slane %v990, %v1042
        %v1044 = vsel %vm790, %v1043, %v1039
        %v1045 = vlaneseq
        %v1046 = vshrl.u32 %v1045, 7
        %v1047 = vsub.s32 %v780, %v1046
        %v1048 = vrot.slane %v993, %v1047
        %v1049 = vlaneseq
        %v1050 = vshrl.u32 %v1049, 7
        %v1051 = vsub.s32 %v785, %v1050
        %v1052 = vrot.slane %v996, %v1051
        %v1053 = vsel %vm790, %v1052, %v1048
        %v1054 = vlaneseq
        %v1055 = vshrl.u32 %v1054, 7
        %v1056 = vsub.s32 %v780, %v1055
        %v1057 = vrot.slane %v999, %v1056
        %v1058 = vlaneseq
        %v1059 = vshrl.u32 %v1058, 7
        %v1060 = vsub.s32 %v785, %v1059
        %v1061 = vrot.slane %v1002, %v1060
        %v1062 = vsel %vm790, %v1061, %v1057
        %v1063 = vlaneseq
        %v1064 = vshrl.u32 %v1063, 7
        %v1065 = vsub.s32 %v780, %v1064
        %v1066 = vrot.slane %v1005, %v1065
        %v1067 = vlaneseq
        %v1068 = vshrl.u32 %v1067, 7
        %v1069 = vsub.s32 %v785, %v1068
        %v1070 = vrot.slane %v1008, %v1069
        %v1071 = vsel %vm790, %v1070, %v1066
        %v1072 = vlaneseq
        %v1073 = vshrl.u32 %v1072, 7
        %v1074 = vsub.s32 %v780, %v1073
        %v1075 = vrot.slane %v1011, %v1074
        %v1076 = vlaneseq
        %v1077 = vshrl.u32 %v1076, 7
        %v1078 = vsub.s32 %v785, %v1077
        %v1079 = vrot.slane %v1014, %v1078
        %v1080 = vsel %vm790, %v1079, %v1075
        %v1081 = vlaneseq
        %v1082 = vshrl.u32 %v1081, 7
        %v1083 = vsub.s32 %v780, %v1082
        %v1084 = vrot.slane %v1017, %v1083
        %v1085 = vlaneseq
        %v1086 = vshrl.u32 %v1085, 7
        %v1087 = vsub.s32 %v785, %v1086
        %v1088 = vrot.slane %v1020, %v1087
        %v1089 = vsel %vm790, %v1088, %v1084
        %v1090 = vlaneseq
        %v1091 = vshrl.u32 %v1090, 7
        %v1092 = vsub.s32 %v780, %v1091
        %v1093 = vrot.slane %v1023, %v1092
        %v1094 = vlaneseq
        %v1095 = vshrl.u32 %v1094, 7
        %v1096 = vsub.s32 %v785, %v1095
        %v1097 = vrot.slane %v1026, %v1096
        %v1098 = vsel %vm790, %v1097, %v1093
        %v1099 = vsel %vm855, %v1044, %v1035
        %v1100 = vsel %vm857, %v1053, %v1099
        %v1101 = vsel %vm859, %v1062, %v1100
        %v1102 = vsel %vm861, %v1071, %v1101
        %v1103 = vsel %vm863, %v1080, %v1102
        %v1104 = vsel %vm865, %v1089, %v1103
        %v1105 = vsel %vm867, %v1098, %v1104
        %v1107 = vsel %vm870, %v1105, 0.0
        %1108 = vadd.xlane.f32.xlu0 %v1107
        %v1109 = vpop.xlane.xlu0 %1108
        %v1110 = vrcp.pop %v1109
        %v1111 = vmul.f32 %v1109, %v1110
        %v1112 = vsub.f32 2.0, %v1111
        %v1113 = vmul.f32 %v1110, %v1112
        %v1114 = vmul.f32 %v1109, %v1113
        %v1115 = vsub.f32 2.0, %v1114
        %v1116 = vmul.f32 %v1113, %v1115
        %v1117 = vsel %vm870, %v1035, 0
        %1119 = vmatprep.subr.mxu0 0.0
        %1120 = vmatpush1.msra.mxu0 0.0
        %1121 = vmatprep.subr.mxu0 0.0
        %1122 = vmatpush1.msra.mxu0 0.0
        %1123 = vmatprep.subr.mxu0 0.0
        %1124 = vmatpush1.msra.mxu0 0.0
        %1125 = vmatprep.subr.mxu0 0.0
        %1126 = vmatpush1.msra.mxu0 0.0
        %1127 = vmatprep.subr.mxu0 0.0
        %1128 = vmatpush1.msra.mxu0 0.0
        %1129 = vmatprep.subr.mxu0 0.0
        %1130 = vmatpush1.msra.mxu0 0.0
        %1131 = vmatprep.subr.mxu0 0.0
        %1132 = vmatpush1.msra.mxu0 0.0
        %1133 = vmatprep.subr.mxu0 0.0
        %1134 = vmatpush1.msra.mxu0 0.0
        %1135 = vmatprep.subr.mxu0 0.0
        %1136 = vmatpush1.msra.mxu0 0.0
        %1137 = vmatprep.subr.mxu0 0.0
        %1138 = vmatpush1.msra.mxu0 0.0
        %1139 = vmatprep.subr.mxu0 0.0
        %1140 = vmatpush1.msra.mxu0 0.0
        %1141 = vmatprep.subr.mxu0 0.0
        %1142 = vmatpush1.msra.mxu0 0.0
        %1143 = vmatprep.subr.mxu0 0.0
        %1144 = vmatpush1.msra.mxu0 0.0
        %1145 = vmatprep.subr.mxu0 0.0
        %1146 = vmatpush1.msra.mxu0 0.0
        %1147 = vmatprep.subr.mxu0 0.0
        %1148 = vmatpush1.msra.mxu0 %v262
        %1149 = vmatprep.subr.mxu0 0.0
        %1150 = vmatpush1.msra.mxu0 %v261
        %1151 = vmatprep.subr.mxu0 0.0
        %1152 = vmatpush2.msra.mxu0 0.0
        %1153 = vmatprep.subr.mxu0 0.0
        %1154 = vmatpush2.msra.mxu0 0.0
        %1155 = vmatprep.subr.mxu0 0.0
        %1156 = vmatpush2.msra.mxu0 0.0
        %1157 = vmatprep.subr.mxu0 0.0
        %1158 = vmatpush2.msra.mxu0 0.0
        %1159 = vmatprep.subr.mxu0 0.0
        %1160 = vmatpush2.msra.mxu0 0.0
        %1161 = vmatprep.subr.mxu0 0.0
        %1162 = vmatpush2.msra.mxu0 0.0
        %1163 = vmatprep.subr.mxu0 0.0
        %1164 = vmatpush2.msra.mxu0 0.0
        %1165 = vmatprep.subr.mxu0 0.0
        %1166 = vmatpush2.msra.mxu0 0.0
        %1167 = vmatprep.subr.mxu0 0.0
        %1168 = vmatpush2.msra.mxu0 0.0
        %1169 = vmatprep.subr.mxu0 0.0
        %1170 = vmatpush2.msra.mxu0 0.0
        %1171 = vmatprep.subr.mxu0 0.0
        %1172 = vmatpush2.msra.mxu0 0.0
        %1173 = vmatprep.subr.mxu0 0.0
        %1174 = vmatpush2.msra.mxu0 0.0
        %1175 = vmatprep.subr.mxu0 0.0
        %1176 = vmatpush2.msra.mxu0 0.0
        %1177 = vmatprep.subr.mxu0 0.0
        %1178 = vmatpush2.msra.mxu0 0.0
        %1179 = vmatprep.subr.mxu0 0.0
        %1180 = vmatpush2.msra.mxu0 0.0
        %1181 = vmatprep.subr.mxu0 0.0
        %1182 = vmatpush2.msra.mxu0 0.0
        %1183 = vmatprep.mubr.f32.mxu0 0.0
        %1184 = vmatmul.mubr.f32.gmra.mxu0 %v1117
        %v1185 = vpop.f32.mrf.mxu0
        %v1186 = vadd.f32 0.0, %v1185
        %v1187 = vpop.f32.mrf.mxu0
        %1188 = vdwg.mxu0
        %v1189 = vsel %vm870, %v1044, 0
        %1191 = vmatprep.subr.mxu0 0.0
        %1192 = vmatpush1.msra.mxu0 0.0
        %1193 = vmatprep.subr.mxu0 0.0
        %1194 = vmatpush1.msra.mxu0 0.0
        %1195 = vmatprep.subr.mxu0 0.0
        %1196 = vmatpush1.msra.mxu0 0.0
        %1197 = vmatprep.subr.mxu0 0.0
        %1198 = vmatpush1.msra.mxu0 0.0
        %1199 = vmatprep.subr.mxu0 0.0
        %1200 = vmatpush1.msra.mxu0 0.0
        %1201 = vmatprep.subr.mxu0 0.0
        %1202 = vmatpush1.msra.mxu0 0.0
        %1203 = vmatprep.subr.mxu0 0.0
        %1204 = vmatpush1.msra.mxu0 0.0
        %1205 = vmatprep.subr.mxu0 0.0
        %1206 = vmatpush1.msra.mxu0 0.0
        %1207 = vmatprep.subr.mxu0 0.0
        %1208 = vmatpush1.msra.mxu0 0.0
        %1209 = vmatprep.subr.mxu0 0.0
        %1210 = vmatpush1.msra.mxu0 0.0
        %1211 = vmatprep.subr.mxu0 0.0
        %1212 = vmatpush1.msra.mxu0 0.0
        %1213 = vmatprep.subr.mxu0 0.0
        %1214 = vmatpush1.msra.mxu0 0.0
        %1215 = vmatprep.subr.mxu0 0.0
        %1216 = vmatpush1.msra.mxu0 0.0
        %1217 = vmatprep.subr.mxu0 0.0
        %1218 = vmatpush1.msra.mxu0 0.0
        %1219 = vmatprep.subr.mxu0 0.0
        %1220 = vmatpush1.msra.mxu0 %v264
        %1221 = vmatprep.subr.mxu0 0.0
        %1222 = vmatpush1.msra.mxu0 %v263
        %1223 = vmatprep.subr.mxu0 0.0
        %1224 = vmatpush2.msra.mxu0 0.0
        %1225 = vmatprep.subr.mxu0 0.0
        %1226 = vmatpush2.msra.mxu0 0.0
        %1227 = vmatprep.subr.mxu0 0.0
        %1228 = vmatpush2.msra.mxu0 0.0
        %1229 = vmatprep.subr.mxu0 0.0
        %1230 = vmatpush2.msra.mxu0 0.0
        %1231 = vmatprep.subr.mxu0 0.0
        %1232 = vmatpush2.msra.mxu0 0.0
        %1233 = vmatprep.subr.mxu0 0.0
        %1234 = vmatpush2.msra.mxu0 0.0
        %1235 = vmatprep.subr.mxu0 0.0
        %1236 = vmatpush2.msra.mxu0 0.0
        %1237 = vmatprep.subr.mxu0 0.0
        %1238 = vmatpush2.msra.mxu0 0.0
        %1239 = vmatprep.subr.mxu0 0.0
        %1240 = vmatpush2.msra.mxu0 0.0
        %1241 = vmatprep.subr.mxu0 0.0
        %1242 = vmatpush2.msra.mxu0 0.0
        %1243 = vmatprep.subr.mxu0 0.0
        %1244 = vmatpush2.msra.mxu0 0.0
        %1245 = vmatprep.subr.mxu0 0.0
        %1246 = vmatpush2.msra.mxu0 0.0
        %1247 = vmatprep.subr.mxu0 0.0
        %1248 = vmatpush2.msra.mxu0 0.0
        %1249 = vmatprep.subr.mxu0 0.0
        %1250 = vmatpush2.msra.mxu0 0.0
        %1251 = vmatprep.subr.mxu0 0.0
        %1252 = vmatpush2.msra.mxu0 0.0
        %1253 = vmatprep.subr.mxu0 0.0
        %1254 = vmatpush2.msra.mxu0 0.0
        %1255 = vmatprep.mubr.f32.mxu0 0.0
        %1256 = vmatmul.mubr.f32.gmra.mxu0 %v1189
        %v1257 = vpop.f32.mrf.mxu0
        %v1258 = vadd.f32 0.0, %v1257
        %v1259 = vpop.f32.mrf.mxu0
        %1260 = vdwg.mxu0
        %v1261 = vsel %vm870, %v1053, 0
        %1263 = vmatprep.subr.mxu0 0.0
        %1264 = vmatpush1.msra.mxu0 0.0
        %1265 = vmatprep.subr.mxu0 0.0
        %1266 = vmatpush1.msra.mxu0 0.0
        %1267 = vmatprep.subr.mxu0 0.0
        %1268 = vmatpush1.msra.mxu0 0.0
        %1269 = vmatprep.subr.mxu0 0.0
        %1270 = vmatpush1.msra.mxu0 0.0
        %1271 = vmatprep.subr.mxu0 0.0
        %1272 = vmatpush1.msra.mxu0 0.0
        %1273 = vmatprep.subr.mxu0 0.0
        %1274 = vmatpush1.msra.mxu0 0.0
        %1275 = vmatprep.subr.mxu0 0.0
        %1276 = vmatpush1.msra.mxu0 0.0
        %1277 = vmatprep.subr.mxu0 0.0
        %1278 = vmatpush1.msra.mxu0 0.0
        %1279 = vmatprep.subr.mxu0 0.0
        %1280 = vmatpush1.msra.mxu0 0.0
        %1281 = vmatprep.subr.mxu0 0.0
        %1282 = vmatpush1.msra.mxu0 0.0
        %1283 = vmatprep.subr.mxu0 0.0
        %1284 = vmatpush1.msra.mxu0 0.0
        %1285 = vmatprep.subr.mxu0 0.0
        %1286 = vmatpush1.msra.mxu0 0.0
        %1287 = vmatprep.subr.mxu0 0.0
        %1288 = vmatpush1.msra.mxu0 0.0
        %1289 = vmatprep.subr.mxu0 0.0
        %1290 = vmatpush1.msra.mxu0 0.0
        %1291 = vmatprep.subr.mxu0 0.0
        %1292 = vmatpush1.msra.mxu0 %v266
        %1293 = vmatprep.subr.mxu0 0.0
        %1294 = vmatpush1.msra.mxu0 %v265
        %1295 = vmatprep.subr.mxu0 0.0
        %1296 = vmatpush2.msra.mxu0 0.0
        %1297 = vmatprep.subr.mxu0 0.0
        %1298 = vmatpush2.msra.mxu0 0.0
        %1299 = vmatprep.subr.mxu0 0.0
        %1300 = vmatpush2.msra.mxu0 0.0
        %1301 = vmatprep.subr.mxu0 0.0
        %1302 = vmatpush2.msra.mxu0 0.0
        %1303 = vmatprep.subr.mxu0 0.0
        %1304 = vmatpush2.msra.mxu0 0.0
        %1305 = vmatprep.subr.mxu0 0.0
        %1306 = vmatpush2.msra.mxu0 0.0
        %1307 = vmatprep.subr.mxu0 0.0
        %1308 = vmatpush2.msra.mxu0 0.0
        %1309 = vmatprep.subr.mxu0 0.0
        %1310 = vmatpush2.msra.mxu0 0.0
        %1311 = vmatprep.subr.mxu0 0.0
        %1312 = vmatpush2.msra.mxu0 0.0
        %1313 = vmatprep.subr.mxu0 0.0
        %1314 = vmatpush2.msra.mxu0 0.0
        %1315 = vmatprep.subr.mxu0 0.0
        %1316 = vmatpush2.msra.mxu0 0.0
        %1317 = vmatprep.subr.mxu0 0.0
        %1318 = vmatpush2.msra.mxu0 0.0
        %1319 = vmatprep.subr.mxu0 0.0
        %1320 = vmatpush2.msra.mxu0 0.0
        %1321 = vmatprep.subr.mxu0 0.0
        %1322 = vmatpush2.msra.mxu0 0.0
        %1323 = vmatprep.subr.mxu0 0.0
        %1324 = vmatpush2.msra.mxu0 0.0
        %1325 = vmatprep.subr.mxu0 0.0
        %1326 = vmatpush2.msra.mxu0 0.0
        %1327 = vmatprep.mubr.f32.mxu0 0.0
        %1328 = vmatmul.mubr.f32.gmra.mxu0 %v1261
        %v1329 = vpop.f32.mrf.mxu0
        %v1330 = vadd.f32 0.0, %v1329
        %v1331 = vpop.f32.mrf.mxu0
        %1332 = vdwg.mxu0
        %v1333 = vsel %vm870, %v1062, 0
        %1335 = vmatprep.subr.mxu0 0.0
        %1336 = vmatpush1.msra.mxu0 0.0
        %1337 = vmatprep.subr.mxu0 0.0
        %1338 = vmatpush1.msra.mxu0 0.0
        %1339 = vmatprep.subr.mxu0 0.0
        %1340 = vmatpush1.msra.mxu0 0.0
        %1341 = vmatprep.subr.mxu0 0.0
        %1342 = vmatpush1.msra.mxu0 0.0
        %1343 = vmatprep.subr.mxu0 0.0
        %1344 = vmatpush1.msra.mxu0 0.0
        %1345 = vmatprep.subr.mxu0 0.0
        %1346 = vmatpush1.msra.mxu0 0.0
        %1347 = vmatprep.subr.mxu0 0.0
        %1348 = vmatpush1.msra.mxu0 0.0
        %1349 = vmatprep.subr.mxu0 0.0
        %1350 = vmatpush1.msra.mxu0 0.0
        %1351 = vmatprep.subr.mxu0 0.0
        %1352 = vmatpush1.msra.mxu0 0.0
        %1353 = vmatprep.subr.mxu0 0.0
        %1354 = vmatpush1.msra.mxu0 0.0
        %1355 = vmatprep.subr.mxu0 0.0
        %1356 = vmatpush1.msra.mxu0 0.0
        %1357 = vmatprep.subr.mxu0 0.0
        %1358 = vmatpush1.msra.mxu0 0.0
        %1359 = vmatprep.subr.mxu0 0.0
        %1360 = vmatpush1.msra.mxu0 0.0
        %1361 = vmatprep.subr.mxu0 0.0
        %1362 = vmatpush1.msra.mxu0 0.0
        %1363 = vmatprep.subr.mxu0 0.0
        %1364 = vmatpush1.msra.mxu0 %v268
        %1365 = vmatprep.subr.mxu0 0.0
        %1366 = vmatpush1.msra.mxu0 %v267
        %1367 = vmatprep.subr.mxu0 0.0
        %1368 = vmatpush2.msra.mxu0 0.0
        %1369 = vmatprep.subr.mxu0 0.0
        %1370 = vmatpush2.msra.mxu0 0.0
        %1371 = vmatprep.subr.mxu0 0.0
        %1372 = vmatpush2.msra.mxu0 0.0
        %1373 = vmatprep.subr.mxu0 0.0
        %1374 = vmatpush2.msra.mxu0 0.0
        %1375 = vmatprep.subr.mxu0 0.0
        %1376 = vmatpush2.msra.mxu0 0.0
        %1377 = vmatprep.subr.mxu0 0.0
        %1378 = vmatpush2.msra.mxu0 0.0
        %1379 = vmatprep.subr.mxu0 0.0
        %1380 = vmatpush2.msra.mxu0 0.0
        %1381 = vmatprep.subr.mxu0 0.0
        %1382 = vmatpush2.msra.mxu0 0.0
        %1383 = vmatprep.subr.mxu0 0.0
        %1384 = vmatpush2.msra.mxu0 0.0
        %1385 = vmatprep.subr.mxu0 0.0
        %1386 = vmatpush2.msra.mxu0 0.0
        %1387 = vmatprep.subr.mxu0 0.0
        %1388 = vmatpush2.msra.mxu0 0.0
        %1389 = vmatprep.subr.mxu0 0.0
        %1390 = vmatpush2.msra.mxu0 0.0
        %1391 = vmatprep.subr.mxu0 0.0
        %1392 = vmatpush2.msra.mxu0 0.0
        %1393 = vmatprep.subr.mxu0 0.0
        %1394 = vmatpush2.msra.mxu0 0.0
        %1395 = vmatprep.subr.mxu0 0.0
        %1396 = vmatpush2.msra.mxu0 0.0
        %1397 = vmatprep.subr.mxu0 0.0
        %1398 = vmatpush2.msra.mxu0 0.0
        %1399 = vmatprep.mubr.f32.mxu0 0.0
        %1400 = vmatmul.mubr.f32.gmra.mxu0 %v1333
        %v1401 = vpop.f32.mrf.mxu0
        %v1402 = vadd.f32 0.0, %v1401
        %v1403 = vpop.f32.mrf.mxu0
        %1404 = vdwg.mxu0
        %v1405 = vsel %vm870, %v1071, 0
        %1407 = vmatprep.subr.mxu0 0.0
        %1408 = vmatpush1.msra.mxu0 0.0
        %1409 = vmatprep.subr.mxu0 0.0
        %1410 = vmatpush1.msra.mxu0 0.0
        %1411 = vmatprep.subr.mxu0 0.0
        %1412 = vmatpush1.msra.mxu0 0.0
        %1413 = vmatprep.subr.mxu0 0.0
        %1414 = vmatpush1.msra.mxu0 0.0
        %1415 = vmatprep.subr.mxu0 0.0
        %1416 = vmatpush1.msra.mxu0 0.0
        %1417 = vmatprep.subr.mxu0 0.0
        %1418 = vmatpush1.msra.mxu0 0.0
        %1419 = vmatprep.subr.mxu0 0.0
        %1420 = vmatpush1.msra.mxu0 0.0
        %1421 = vmatprep.subr.mxu0 0.0
        %1422 = vmatpush1.msra.mxu0 0.0
        %1423 = vmatprep.subr.mxu0 0.0
        %1424 = vmatpush1.msra.mxu0 0.0
        %1425 = vmatprep.subr.mxu0 0.0
        %1426 = vmatpush1.msra.mxu0 0.0
        %1427 = vmatprep.subr.mxu0 0.0
        %1428 = vmatpush1.msra.mxu0 0.0
        %1429 = vmatprep.subr.mxu0 0.0
        %1430 = vmatpush1.msra.mxu0 0.0
        %1431 = vmatprep.subr.mxu0 0.0
        %1432 = vmatpush1.msra.mxu0 0.0
        %1433 = vmatprep.subr.mxu0 0.0
        %1434 = vmatpush1.msra.mxu0 0.0
        %1435 = vmatprep.subr.mxu0 0.0
        %1436 = vmatpush1.msra.mxu0 %v270
        %1437 = vmatprep.subr.mxu0 0.0
        %1438 = vmatpush1.msra.mxu0 %v269
        %1439 = vmatprep.subr.mxu0 0.0
        %1440 = vmatpush2.msra.mxu0 0.0
        %1441 = vmatprep.subr.mxu0 0.0
        %1442 = vmatpush2.msra.mxu0 0.0
        %1443 = vmatprep.subr.mxu0 0.0
        %1444 = vmatpush2.msra.mxu0 0.0
        %1445 = vmatprep.subr.mxu0 0.0
        %1446 = vmatpush2.msra.mxu0 0.0
        %1447 = vmatprep.subr.mxu0 0.0
        %1448 = vmatpush2.msra.mxu0 0.0
        %1449 = vmatprep.subr.mxu0 0.0
        %1450 = vmatpush2.msra.mxu0 0.0
        %1451 = vmatprep.subr.mxu0 0.0
        %1452 = vmatpush2.msra.mxu0 0.0
        %1453 = vmatprep.subr.mxu0 0.0
        %1454 = vmatpush2.msra.mxu0 0.0
        %1455 = vmatprep.subr.mxu0 0.0
        %1456 = vmatpush2.msra.mxu0 0.0
        %1457 = vmatprep.subr.mxu0 0.0
        %1458 = vmatpush2.msra.mxu0 0.0
        %1459 = vmatprep.subr.mxu0 0.0
        %1460 = vmatpush2.msra.mxu0 0.0
        %1461 = vmatprep.subr.mxu0 0.0
        %1462 = vmatpush2.msra.mxu0 0.0
        %1463 = vmatprep.subr.mxu0 0.0
        %1464 = vmatpush2.msra.mxu0 0.0
        %1465 = vmatprep.subr.mxu0 0.0
        %1466 = vmatpush2.msra.mxu0 0.0
        %1467 = vmatprep.subr.mxu0 0.0
        %1468 = vmatpush2.msra.mxu0 0.0
        %1469 = vmatprep.subr.mxu0 0.0
        %1470 = vmatpush2.msra.mxu0 0.0
        %1471 = vmatprep.mubr.f32.mxu0 0.0
        %1472 = vmatmul.mubr.f32.gmra.mxu0 %v1405
        %v1473 = vpop.f32.mrf.mxu0
        %v1474 = vadd.f32 0.0, %v1473
        %v1475 = vpop.f32.mrf.mxu0
        %1476 = vdwg.mxu0
        %v1477 = vsel %vm870, %v1080, 0
        %1479 = vmatprep.subr.mxu0 0.0
        %1480 = vmatpush1.msra.mxu0 0.0
        %1481 = vmatprep.subr.mxu0 0.0
        %1482 = vmatpush1.msra.mxu0 0.0
        %1483 = vmatprep.subr.mxu0 0.0
        %1484 = vmatpush1.msra.mxu0 0.0
        %1485 = vmatprep.subr.mxu0 0.0
        %1486 = vmatpush1.msra.mxu0 0.0
        %1487 = vmatprep.subr.mxu0 0.0
        %1488 = vmatpush1.msra.mxu0 0.0
        %1489 = vmatprep.subr.mxu0 0.0
        %1490 = vmatpush1.msra.mxu0 0.0
        %1491 = vmatprep.subr.mxu0 0.0
        %1492 = vmatpush1.msra.mxu0 0.0
        %1493 = vmatprep.subr.mxu0 0.0
        %1494 = vmatpush1.msra.mxu0 0.0
        %1495 = vmatprep.subr.mxu0 0.0
        %1496 = vmatpush1.msra.mxu0 0.0
        %1497 = vmatprep.subr.mxu0 0.0
        %1498 = vmatpush1.msra.mxu0 0.0
        %1499 = vmatprep.subr.mxu0 0.0
        %1500 = vmatpush1.msra.mxu0 0.0
        %1501 = vmatprep.subr.mxu0 0.0
        %1502 = vmatpush1.msra.mxu0 0.0
        %1503 = vmatprep.subr.mxu0 0.0
        %1504 = vmatpush1.msra.mxu0 0.0
        %1505 = vmatprep.subr.mxu0 0.0
        %1506 = vmatpush1.msra.mxu0 0.0
        %1507 = vmatprep.subr.mxu0 0.0
        %1508 = vmatpush1.msra.mxu0 %v272
        %1509 = vmatprep.subr.mxu0 0.0
        %1510 = vmatpush1.msra.mxu0 %v271
        %1511 = vmatprep.subr.mxu0 0.0
        %1512 = vmatpush2.msra.mxu0 0.0
        %1513 = vmatprep.subr.mxu0 0.0
        %1514 = vmatpush2.msra.mxu0 0.0
        %1515 = vmatprep.subr.mxu0 0.0
        %1516 = vmatpush2.msra.mxu0 0.0
        %1517 = vmatprep.subr.mxu0 0.0
        %1518 = vmatpush2.msra.mxu0 0.0
        %1519 = vmatprep.subr.mxu0 0.0
        %1520 = vmatpush2.msra.mxu0 0.0
        %1521 = vmatprep.subr.mxu0 0.0
        %1522 = vmatpush2.msra.mxu0 0.0
        %1523 = vmatprep.subr.mxu0 0.0
        %1524 = vmatpush2.msra.mxu0 0.0
        %1525 = vmatprep.subr.mxu0 0.0
        %1526 = vmatpush2.msra.mxu0 0.0
        %1527 = vmatprep.subr.mxu0 0.0
        %1528 = vmatpush2.msra.mxu0 0.0
        %1529 = vmatprep.subr.mxu0 0.0
        %1530 = vmatpush2.msra.mxu0 0.0
        %1531 = vmatprep.subr.mxu0 0.0
        %1532 = vmatpush2.msra.mxu0 0.0
        %1533 = vmatprep.subr.mxu0 0.0
        %1534 = vmatpush2.msra.mxu0 0.0
        %1535 = vmatprep.subr.mxu0 0.0
        %1536 = vmatpush2.msra.mxu0 0.0
        %1537 = vmatprep.subr.mxu0 0.0
        %1538 = vmatpush2.msra.mxu0 0.0
        %1539 = vmatprep.subr.mxu0 0.0
        %1540 = vmatpush2.msra.mxu0 0.0
        %1541 = vmatprep.subr.mxu0 0.0
        %1542 = vmatpush2.msra.mxu0 0.0
        %1543 = vmatprep.mubr.f32.mxu0 0.0
        %1544 = vmatmul.mubr.f32.gmra.mxu0 %v1477
        %v1545 = vpop.f32.mrf.mxu0
        %v1546 = vadd.f32 0.0, %v1545
        %v1547 = vpop.f32.mrf.mxu0
        %1548 = vdwg.mxu0
        %v1549 = vsel %vm870, %v1089, 0
        %1551 = vmatprep.subr.mxu0 0.0
        %1552 = vmatpush1.msra.mxu0 0.0
        %1553 = vmatprep.subr.mxu0 0.0
        %1554 = vmatpush1.msra.mxu0 0.0
        %1555 = vmatprep.subr.mxu0 0.0
        %1556 = vmatpush1.msra.mxu0 0.0
        %1557 = vmatprep.subr.mxu0 0.0
        %1558 = vmatpush1.msra.mxu0 0.0
        %1559 = vmatprep.subr.mxu0 0.0
        %1560 = vmatpush1.msra.mxu0 0.0
        %1561 = vmatprep.subr.mxu0 0.0
        %1562 = vmatpush1.msra.mxu0 0.0
        %1563 = vmatprep.subr.mxu0 0.0
        %1564 = vmatpush1.msra.mxu0 0.0
        %1565 = vmatprep.subr.mxu0 0.0
        %1566 = vmatpush1.msra.mxu0 0.0
        %1567 = vmatprep.subr.mxu0 0.0
        %1568 = vmatpush1.msra.mxu0 0.0
        %1569 = vmatprep.subr.mxu0 0.0
        %1570 = vmatpush1.msra.mxu0 0.0
        %1571 = vmatprep.subr.mxu0 0.0
        %1572 = vmatpush1.msra.mxu0 0.0
        %1573 = vmatprep.subr.mxu0 0.0
        %1574 = vmatpush1.msra.mxu0 0.0
        %1575 = vmatprep.subr.mxu0 0.0
        %1576 = vmatpush1.msra.mxu0 0.0
        %1577 = vmatprep.subr.mxu0 0.0
        %1578 = vmatpush1.msra.mxu0 0.0
        %1579 = vmatprep.subr.mxu0 0.0
        %1580 = vmatpush1.msra.mxu0 %v274
        %1581 = vmatprep.subr.mxu0 0.0
        %1582 = vmatpush1.msra.mxu0 %v273
        %1583 = vmatprep.subr.mxu0 0.0
        %1584 = vmatpush2.msra.mxu0 0.0
        %1585 = vmatprep.subr.mxu0 0.0
        %1586 = vmatpush2.msra.mxu0 0.0
        %1587 = vmatprep.subr.mxu0 0.0
        %1588 = vmatpush2.msra.mxu0 0.0
        %1589 = vmatprep.subr.mxu0 0.0
        %1590 = vmatpush2.msra.mxu0 0.0
        %1591 = vmatprep.subr.mxu0 0.0
        %1592 = vmatpush2.msra.mxu0 0.0
        %1593 = vmatprep.subr.mxu0 0.0
        %1594 = vmatpush2.msra.mxu0 0.0
        %1595 = vmatprep.subr.mxu0 0.0
        %1596 = vmatpush2.msra.mxu0 0.0
        %1597 = vmatprep.subr.mxu0 0.0
        %1598 = vmatpush2.msra.mxu0 0.0
        %1599 = vmatprep.subr.mxu0 0.0
        %1600 = vmatpush2.msra.mxu0 0.0
        %1601 = vmatprep.subr.mxu0 0.0
        %1602 = vmatpush2.msra.mxu0 0.0
        %1603 = vmatprep.subr.mxu0 0.0
        %1604 = vmatpush2.msra.mxu0 0.0
        %1605 = vmatprep.subr.mxu0 0.0
        %1606 = vmatpush2.msra.mxu0 0.0
        %1607 = vmatprep.subr.mxu0 0.0
        %1608 = vmatpush2.msra.mxu0 0.0
        %1609 = vmatprep.subr.mxu0 0.0
        %1610 = vmatpush2.msra.mxu0 0.0
        %1611 = vmatprep.subr.mxu0 0.0
        %1612 = vmatpush2.msra.mxu0 0.0
        %1613 = vmatprep.subr.mxu0 0.0
        %1614 = vmatpush2.msra.mxu0 0.0
        %1615 = vmatprep.mubr.f32.mxu0 0.0
        %1616 = vmatmul.mubr.f32.gmra.mxu0 %v1549
        %v1617 = vpop.f32.mrf.mxu0
        %v1618 = vadd.f32 0.0, %v1617
        %v1619 = vpop.f32.mrf.mxu0
        %1620 = vdwg.mxu0
        %v1621 = vsel %vm870, %v1098, 0
        %1623 = vmatprep.subr.mxu0 0.0
        %1624 = vmatpush1.msra.mxu0 0.0
        %1625 = vmatprep.subr.mxu0 0.0
        %1626 = vmatpush1.msra.mxu0 0.0
        %1627 = vmatprep.subr.mxu0 0.0
        %1628 = vmatpush1.msra.mxu0 0.0
        %1629 = vmatprep.subr.mxu0 0.0
        %1630 = vmatpush1.msra.mxu0 0.0
        %1631 = vmatprep.subr.mxu0 0.0
        %1632 = vmatpush1.msra.mxu0 0.0
        %1633 = vmatprep.subr.mxu0 0.0
        %1634 = vmatpush1.msra.mxu0 0.0
        %1635 = vmatprep.subr.mxu0 0.0
        %1636 = vmatpush1.msra.mxu0 0.0
        %1637 = vmatprep.subr.mxu0 0.0
        %1638 = vmatpush1.msra.mxu0 0.0
        %1639 = vmatprep.subr.mxu0 0.0
        %1640 = vmatpush1.msra.mxu0 0.0
        %1641 = vmatprep.subr.mxu0 0.0
        %1642 = vmatpush1.msra.mxu0 0.0
        %1643 = vmatprep.subr.mxu0 0.0
        %1644 = vmatpush1.msra.mxu0 0.0
        %1645 = vmatprep.subr.mxu0 0.0
        %1646 = vmatpush1.msra.mxu0 0.0
        %1647 = vmatprep.subr.mxu0 0.0
        %1648 = vmatpush1.msra.mxu0 0.0
        %1649 = vmatprep.subr.mxu0 0.0
        %1650 = vmatpush1.msra.mxu0 0.0
        %1651 = vmatprep.subr.mxu0 0.0
        %1652 = vmatpush1.msra.mxu0 %v276
        %1653 = vmatprep.subr.mxu0 0.0
        %1654 = vmatpush1.msra.mxu0 %v275
        %1655 = vmatprep.subr.mxu0 0.0
        %1656 = vmatpush2.msra.mxu0 0.0
        %1657 = vmatprep.subr.mxu0 0.0
        %1658 = vmatpush2.msra.mxu0 0.0
        %1659 = vmatprep.subr.mxu0 0.0
        %1660 = vmatpush2.msra.mxu0 0.0
        %1661 = vmatprep.subr.mxu0 0.0
        %1662 = vmatpush2.msra.mxu0 0.0
        %1663 = vmatprep.subr.mxu0 0.0
        %1664 = vmatpush2.msra.mxu0 0.0
        %1665 = vmatprep.subr.mxu0 0.0
        %1666 = vmatpush2.msra.mxu0 0.0
        %1667 = vmatprep.subr.mxu0 0.0
        %1668 = vmatpush2.msra.mxu0 0.0
        %1669 = vmatprep.subr.mxu0 0.0
        %1670 = vmatpush2.msra.mxu0 0.0
        %1671 = vmatprep.subr.mxu0 0.0
        %1672 = vmatpush2.msra.mxu0 0.0
        %1673 = vmatprep.subr.mxu0 0.0
        %1674 = vmatpush2.msra.mxu0 0.0
        %1675 = vmatprep.subr.mxu0 0.0
        %1676 = vmatpush2.msra.mxu0 0.0
        %1677 = vmatprep.subr.mxu0 0.0
        %1678 = vmatpush2.msra.mxu0 0.0
        %1679 = vmatprep.subr.mxu0 0.0
        %1680 = vmatpush2.msra.mxu0 0.0
        %1681 = vmatprep.subr.mxu0 0.0
        %1682 = vmatpush2.msra.mxu0 0.0
        %1683 = vmatprep.subr.mxu0 0.0
        %1684 = vmatpush2.msra.mxu0 0.0
        %1685 = vmatprep.subr.mxu0 0.0
        %1686 = vmatpush2.msra.mxu0 0.0
        %1687 = vmatprep.mubr.f32.mxu0 0.0
        %1688 = vmatmul.mubr.f32.gmra.mxu0 %v1621
        %v1689 = vpop.f32.mrf.mxu0
        %v1690 = vadd.f32 0.0, %v1689
        %v1691 = vpop.f32.mrf.mxu0
        %1692 = vdwg.mxu0
        %v1694 = vrot.slane %v1116, 1
        %v1695 = vrot.slane %v1116, 2
        %v1696 = vrot.slane %v1116, 3
        %v1697 = vrot.slane %v1116, 4
        %v1698 = vrot.slane %v1116, 5
        %v1699 = vrot.slane %v1116, 6
        %v1700 = vrot.slane %v1116, 7
        %v1709 = vmul.f32 %v1186, %v1116
        %v1710 = vmul.f32 %v1258, %v1694
        %v1711 = vmul.f32 %v1330, %v1695
        %v1712 = vmul.f32 %v1402, %v1696
        %v1713 = vmul.f32 %v1474, %v1697
        %v1714 = vmul.f32 %v1546, %v1698
        %v1715 = vmul.f32 %v1618, %v1699
        %v1716 = vmul.f32 %v1690, %v1700
        %v1725 = vrot.slane %v1710, 7
        %v1726 = vsel %vm855, %v1725, %v1709
        %v1727 = vrot.slane %v1711, 6
        %v1728 = vsel %vm857, %v1727, %v1726
        %v1729 = vrot.slane %v1712, 5
        %v1730 = vsel %vm859, %v1729, %v1728
        %v1731 = vrot.slane %v1713, 4
        %v1732 = vsel %vm861, %v1731, %v1730
        %v1733 = vrot.slane %v1714, 3
        %v1734 = vsel %vm863, %v1733, %v1732
        %v1735 = vrot.slane %v1715, 2
        %v1736 = vsel %vm865, %v1735, %v1734
        %v1737 = vrot.slane %v1716, 1
        %v1738 = vsel %vm867, %v1737, %v1736
        %1740 = vst.msk [vmem:[%s259] sm:$0xff] %vm288, %v1738
        %s1741 = sand.u32 %s142, 1
        %s1742 = scalar_lea.sflag [#allocation5], %s1741
        %s1743 = sand.u32 %s142, 1
        %s1744 = smul.addr %s1743, 8
        %s1745 = scalar_lea.vmem [#allocation8], %s1744
        // Predicated region
        $region49: #{tpu_custom_call.1} parent=39 // pred_check
          %p1746 = pneg %p152
        $region50: #{tpu_custom_call.1} parent=39 // pred_check_branch
          %1748 = sbr.rel (%p1746) target = $region52
        $region51: #{tpu_custom_call.1} parent=39 // pred_region
          %s1750 = ssub.s32 128, 128
          %1751 = vsyncadd %s1742, %s1750
          %s1752 = smul.addr %s24, 128
          %s1753 = scalar_lea.hbm %s5, %s1752
          %s1755 = sshll.u32 %s1745, 4
          %s1756 = int_to_ptr.vmem [resolvable:$true] %s1755
          %1758 = dma.vmem_to_hbm [thread:$0]  %s1756, 128, %s1753, %s1742
        $region52: #{tpu_custom_call.1} parent=39 // pred_fallthru
          _
      $region40: #{tpu_custom_call.1} parent=5 // pred_fallthru
        _
      %p1759 = scmp.le.s32.totalorder 2, %s19
      // Predicated region
      $region53: #{tpu_custom_call.1} parent=5 // pred_check
        %p1760 = pneg %p1759
      $region54: #{tpu_custom_call.1} parent=5 // pred_check_branch
        %1762 = sbr.rel (%p1760) target = $region56
      $region55: #{tpu_custom_call.1} parent=5 // pred_region
        %s1763 = ssub.s32 %s19, 2
        // Predicated region
        $region57: #{tpu_custom_call.1} parent=55 // pred_check
          %p1764 = pneg %p158
        $region58: #{tpu_custom_call.1} parent=55 // pred_check_branch
          %1766 = sbr.rel (%p1764) target = $region60
        $region59: #{tpu_custom_call.1} parent=55 // pred_region
          %s1767 = sand.u32 %s143, 1
          %s1768 = scalar_lea.sflag [#allocation5], %s1767
          %s1769 = sand.u32 %s143, 1
          %s1770 = smul.addr %s1769, 8
          %s1771 = scalar_lea.vmem [#allocation8], %s1770
          %1772 = dma.done %s1768, 128
        $region60: #{tpu_custom_call.1} parent=55 // pred_fallthru
          _
      $region56: #{tpu_custom_call.1} parent=5 // pred_fallthru
        _
    $region6: #{tpu_custom_call.1} parent=1 // loop_footer
      %s23 = sadd.s32 1, %s19
    $region7: #{tpu_custom_call.1} parent=1 // loop_footer_branch
      %18 = sbr.rel target = $region3
    $region8: #{tpu_custom_call.1} parent=1 // loop_exit
      _
    %1773 = vsyncpa [#allocation4], 1
    %s1774 = scalar_lea.sflag [#allocation4], 1
    %1775 = vsyncpa %s1774, 1
    %1776 = vsyncpa [#allocation7], 1
    %1777 = vsyncpa [#allocation5], 1
    %s1778 = scalar_lea.sflag [#allocation5], 1
    %1779 = vsyncpa %s1778, 1

</llo_original>
